<compile_context>
chip_gen: v7x
topology: tpu7x:2x2x1
jax: 0.10.0
libtpu: 0.0.40
codegen_flags: <defaults>
</compile_context>

<pallas_src>
import functools
import math

import jax
import jax.numpy as jnp
from jax.experimental import pallas as pl
from jax.experimental.pallas import tpu as pltpu


_TARGET_BLOCK_BYTES = 4 << 20    # per-grid-step footprint target (all blocks)
_MAX_TILE_ROWS = 8192
_MIN_GRID_STEPS = 8              # keep >=8 steps so megacore split is real
_VMEM_LIMIT_BYTES = 32 << 20     # safe on v5e/v6e/v7x; >> our actual need


def _round_up(x, m):
    return ((x + m - 1) // m) * m


def _softplus_f32(x):
    # Numerically stable softplus: max(x, 0) + log1p(exp(-|x|)).
    return jnp.maximum(x, 0.0) + jnp.log1p(jnp.exp(-jnp.abs(x)))


# ------------------------------- kernels ----------------------------------- #

def _fused_packed_kernel(neg_ref, pos_ref, seg_ref, o_ref):
    # neg_ref: (tile_b, G*num_neg)  lane-dense packed negatives
    # pos_ref: (tile_b, G)          matching positive scores
    # seg_ref: (G*num_neg, G)       block-diagonal ones * (1/num_neg)
    sp = _softplus_f32(neg_ref[...].astype(jnp.float32))
    # Segmented row-sum (and the 1/num_neg scale) on the otherwise-idle MXU.
    neg_term = jnp.dot(sp, seg_ref[...],
                       preferred_element_type=jnp.float32,
                       precision=jax.lax.Precision.HIGHEST)        # (tile_b, G)
    pos_term = _softplus_f32(-pos_ref[...].astype(jnp.float32))    # -logsigmoid
    o_ref[...] = (pos_term + neg_term).astype(o_ref.dtype)


def _fused_dense_kernel(neg_ref, pos_ref, o_ref, *, inv_divisor):
    # neg_ref: (tile_r, num_neg) with num_neg a multiple of 128 (lane-dense).
    sp = _softplus_f32(neg_ref[...].astype(jnp.float32))
    # Scale hoisted AFTER the reduction: 1 multiply per row, not per element.
    neg_term = jnp.sum(sp, axis=-1, keepdims=True) * inv_divisor   # (tile_r, 1)
    pos_term = _softplus_f32(-pos_ref[...].astype(jnp.float32))    # (tile_r, 1)
    o_ref[...] = (pos_term + neg_term).astype(o_ref.dtype)


# ---------------------------- tile selection -------------------------------- #

def _pick_tile_rows(nrows, row_bytes):
    """Rows per block from a lane-padded byte budget; keep >=_MIN_GRID_STEPS."""
    budget = _TARGET_BLOCK_BYTES // max(1, row_bytes)
    budget = max(8, (budget // 8) * 8)
    budget = min(budget, _MAX_TILE_ROWS)
    per_step = max(8, _round_up(-(-nrows // _MIN_GRID_STEPS), 8))
    tile = min(budget, per_step)
    return nrows if tile >= nrows else tile


# --------------------------- pallas wrappers -------------------------------- #

def _fused_loss_packed(neg2d, pos1d, divisor, out_dtype):
    """num_neg not a multiple of 128: lane-pack G rows per super-row."""
    rows, num_neg = neg2d.shape
    g = 128 // math.gcd(num_neg, 128)     # smallest G with (G*num_neg) % 128 == 0
    lanes = g * num_neg
    rows_p = _round_up(rows, g)
    if rows_p != rows:                    # pad the tail rows; sliced off below
        neg2d = jnp.pad(neg2d, ((0, rows_p - rows), (0, 0)))
        pos1d = jnp.pad(pos1d, ((0, rows_p - rows),))
    nb = rows_p // g
    neg_pk = neg2d.reshape(nb, lanes)     # contiguous reshape: no copy
    pos_pk = pos1d.reshape(nb, g)

    # Block-diagonal segmented-sum matrix with 1/divisor folded in, so the MXU
    # performs PyTorch's per-element divide-then-sum in a single pass.
    seg = (jnp.arange(lanes, dtype=jnp.int32)[:, None] // num_neg
           == jnp.arange(g, dtype=jnp.int32)[None, :])
    seg = seg.astype(jnp.float32) * jnp.float32(1.0 / divisor)

    in_item = jnp.dtype(neg_pk.dtype).itemsize
    out_item = jnp.dtype(out_dtype).itemsize
    # Lane-padded per-super-row footprint across all blocks in one grid step.
    row_bytes = lanes * in_item + max(g, 128) * (in_item + out_item)
    tile_b = _pick_tile_rows(nb, row_bytes)

    out_pk = pl.pallas_call(
        _fused_packed_kernel,
        out_shape=jax.ShapeDtypeStruct((nb, g), out_dtype),
        grid_spec=pl.GridSpec(
            grid=(pl.cdiv(nb, tile_b),),
            in_specs=[
                pl.BlockSpec((tile_b, lanes), lambda i: (i, 0)),
                pl.BlockSpec((tile_b, g), lambda i: (i, 0)),
                pl.BlockSpec((lanes, g), lambda i: (0, 0)),
            ],
            out_specs=pl.BlockSpec((tile_b, g), lambda i: (i, 0)),
        ),
        compiler_params=pltpu.CompilerParams(
            dimension_semantics=("parallel",),
            vmem_limit_bytes=_VMEM_LIMIT_BYTES),
    )(neg_pk, pos_pk, seg)
    return out_pk.reshape(rows_p)[:rows]


def _fused_loss_dense(neg2d, pos1d, divisor, out_dtype):
    """num_neg a multiple of 128: already lane-dense, plain row reduction."""
    rows, num_neg = neg2d.shape
    pos2d = pos1d.reshape(rows, 1)

    in_item = jnp.dtype(neg2d.dtype).itemsize
    out_item = jnp.dtype(out_dtype).itemsize
    row_bytes = num_neg * in_item + 128 * in_item + 128 * out_item
    tile_r = _pick_tile_rows(rows, row_bytes)

    kernel = functools.partial(_fused_dense_kernel,
                               inv_divisor=1.0 / float(divisor))
    out2d = pl.pallas_call(
        kernel,
        out_shape=jax.ShapeDtypeStruct((rows, 1), out_dtype),
        grid_spec=pl.GridSpec(
            grid=(pl.cdiv(rows, tile_r),),
            in_specs=[
                pl.BlockSpec((tile_r, num_neg), lambda i: (i, 0)),
                pl.BlockSpec((tile_r, 1), lambda i: (i, 0)),
            ],
            out_specs=pl.BlockSpec((tile_r, 1), lambda i: (i, 0)),
        ),
        compiler_params=pltpu.CompilerParams(
            dimension_semantics=("parallel",),
            vmem_limit_bytes=_VMEM_LIMIT_BYTES),
    )(neg2d, pos2d)
    return out2d.reshape(rows)


# ------------------------------ public API ---------------------------------- #

def binary_ce_loss(pos_score, neg_score):
    """Pallas TPU implementation of BinaryCELoss.forward (no reduction).

    Matches: -F.logsigmoid(pos_score.squeeze())
             + torch.sum(F.softplus(neg_score) / neg_score.size(2), dim=-1)
    """
    assert neg_score.ndim >= 3, "neg_score must have >= 3 dims (uses .size(2))"
    divisor = neg_score.shape[2]
    num_neg = neg_score.shape[-1]
    out_dtype = jnp.result_type(pos_score.dtype, neg_score.dtype)

    pos_sq = jnp.squeeze(pos_score)
    lead_shape = neg_score.shape[:-1]
    # PyTorch-identical broadcasting of the two terms, resolved up front so the
    # whole loss is produced by one fused kernel.
    out_shape = jnp.broadcast_shapes(pos_sq.shape, lead_shape)
    pos_b = jnp.broadcast_to(pos_sq, out_shape)
    neg_b = jnp.broadcast_to(neg_score, out_shape + (num_neg,))

    rows = math.prod(out_shape) if out_shape else 1
    neg2d = neg_b.reshape(rows, num_neg)
    pos1d = pos_b.reshape(rows)

    if num_neg % 128 == 0:
        flat = _fused_loss_dense(neg2d, pos1d, divisor, out_dtype)
    else:
        flat = _fused_loss_packed(neg2d, pos1d, divisor, out_dtype)
    return flat.reshape(out_shape)


def _reference(pos_score, neg_score):
    pos = jnp.squeeze(pos_score).astype(jnp.float32)
    neg = neg_score.astype(jnp.float32)
    return (-jax.nn.log_sigmoid(pos)
            + jnp.sum(jax.nn.softplus(neg) / neg_score.shape[2], axis=-1))


if __name__ == "__main__":
    key = jax.random.PRNGKey(0)
    ks = jax.random.split(key, 8)

    def run_case(pos, neg, atol, rtol):
        out = jax.block_until_ready(binary_ce_loss(pos, neg))
        ref = _reference(pos, neg)
        assert out.shape == ref.shape, (out.shape, ref.shape)
        err = float(jnp.max(jnp.abs(out.astype(jnp.float32) - ref)))
        assert jnp.allclose(out.astype(jnp.float32), ref, atol=atol, rtol=rtol), err
        return out

    # 1) Packed path (num_neg=24 -> G=16), multi-step "parallel" grid.
    pos = jax.random.normal(ks[0], (64, 8, 1), dtype=jnp.float32)
    neg = jax.random.normal(ks[1], (64, 8, 24), dtype=jnp.float32)
    run_case(pos, neg, 1e-4, 1e-4)

    # 2) Packed path with ragged row count (rows % G != 0 -> pad + slice back).
    pos = jax.random.normal(ks[2], (5, 5, 1), dtype=jnp.float32)
    neg = jax.random.normal(ks[3], (5, 5, 24), dtype=jnp.float32)
    run_case(pos, neg, 1e-4, 1e-4)

    # 3) Dense path (num_neg already a multiple of 128).
    pos = jax.random.normal(ks[4], (4, 4, 1), dtype=jnp.float32)
    neg = jax.random.normal(ks[5], (4, 4, 128), dtype=jnp.float32)
    run_case(pos, neg, 1e-4, 1e-4)

    # 4) bf16 in -> bf16 out (f32 internal math, rounded once on store).
    pos = jax.random.normal(ks[6], (16, 8, 1), dtype=jnp.bfloat16)
    neg = jax.random.normal(ks[7], (16, 8, 24), dtype=jnp.bfloat16)
    out = run_case(pos, neg, 2e-2, 2e-2)
    assert out.dtype == jnp.bfloat16, out.dtype

    print("KERNEL_OK")
</pallas_src>

<mosaic_0001>
module attributes {stable_mosaic.version = 11 : i64} {
  func.func @_fused_packed_kernel(%arg0: i32, %arg1: memref<8x384xf32, #tpu.memory_space<vmem>>, %arg2: memref<8x16xf32, #tpu.memory_space<vmem>>, %arg3: memref<384x16xf32, #tpu.memory_space<vmem>>, %arg4: memref<8x16xf32, #tpu.memory_space<vmem>>) attributes {dimension_semantics = [#tpu.dimension_semantics<parallel>], iteration_bounds = array<i64: 4>, scalar_prefetch = 0 : i64, scratch_operands = 0 : i64, tpu.core_type = #tpu.core_type<tc>, window_params = [{transform_indices = @transform_0, window_bounds = array<i64: 8, 384>}, {transform_indices = @transform_1, window_bounds = array<i64: 8, 16>}, {pipeline_mode = #tpu.pipeline_mode<synchronous>, transform_indices = @transform_2, window_bounds = array<i64: 384, 16>}, {transform_indices = @transform_3, window_bounds = array<i64: 8, 16>}]} {
    %c0 = arith.constant 0 : index
    %c0_0 = arith.constant 0 : index
    %0 = vector.load %arg1[%c0, %c0_0] : memref<8x384xf32, #tpu.memory_space<vmem>>, vector<8x384xf32>
    %cst = arith.constant 0.000000e+00 : f32
    %1 = vector.broadcast %cst : f32 to vector<8x384xf32>
    %2 = arith.maximumf %0, %1 : vector<8x384xf32>
    %3 = math.absf %0 : vector<8x384xf32>
    %cst_1 = arith.constant 0.000000e+00 : f32
    %4 = vector.broadcast %cst_1 : f32 to vector<8x384xf32>
    %5 = arith.subf %4, %3 : vector<8x384xf32>
    %6 = math.exp %5 : vector<8x384xf32>
    %7 = math.log1p %6 : vector<8x384xf32>
    %8 = arith.addf %2, %7 : vector<8x384xf32>
    %c0_2 = arith.constant 0 : index
    %c0_3 = arith.constant 0 : index
    %9 = vector.load %arg3[%c0_2, %c0_3] : memref<384x16xf32, #tpu.memory_space<vmem>>, vector<384x16xf32>
    %cst_4 = arith.constant dense<0.000000e+00> : vector<8x16xf32>
    %10 = tpu.matmul %8, %9, %cst_4 {dimension_numbers = #tpu.dot_dimension_numbers<[1], [0], [0], [1], [0, 0, 1, 1], [], []>, precision = #tpu.contract_precision<fp32>} : vector<8x384xf32>, vector<384x16xf32>, vector<8x16xf32> -> vector<8x16xf32>
    %c0_5 = arith.constant 0 : index
    %c0_6 = arith.constant 0 : index
    %11 = vector.load %arg2[%c0_5, %c0_6] : memref<8x16xf32, #tpu.memory_space<vmem>>, vector<8x16xf32>
    %cst_7 = arith.constant 0.000000e+00 : f32
    %12 = vector.broadcast %cst_7 : f32 to vector<8x16xf32>
    %13 = arith.subf %12, %11 : vector<8x16xf32>
    %cst_8 = arith.constant 0.000000e+00 : f32
    %14 = vector.broadcast %cst_8 : f32 to vector<8x16xf32>
    %15 = arith.maximumf %13, %14 : vector<8x16xf32>
    %16 = math.absf %13 : vector<8x16xf32>
    %cst_9 = arith.constant 0.000000e+00 : f32
    %17 = vector.broadcast %cst_9 : f32 to vector<8x16xf32>
    %18 = arith.subf %17, %16 : vector<8x16xf32>
    %19 = math.exp %18 : vector<8x16xf32>
    %20 = math.log1p %19 : vector<8x16xf32>
    %21 = arith.addf %15, %20 : vector<8x16xf32>
    %22 = arith.addf %21, %10 : vector<8x16xf32>
    %c0_10 = arith.constant 0 : index
    %c0_11 = arith.constant 0 : index
    %23 = vector.load %arg4[%c0_10, %c0_11] : memref<8x16xf32, #tpu.memory_space<vmem>>, vector<8x16xf32>
    tpu.vector_store %arg4[%c0_10, %c0_11], %22 {strides = array<i32>} : memref<8x16xf32, #tpu.memory_space<vmem>>, vector<8x16xf32>,
    return
  }
  func.func @transform_0(%arg0: i32) -> (i32, i32) {
    %c0_i32 = arith.constant 0 : i32
    %c0_i32_0 = arith.constant 0 : i32
    return %arg0, %c0_i32 : i32, i32
  }
  func.func @transform_1(%arg0: i32) -> (i32, i32) {
    %c0_i32 = arith.constant 0 : i32
    %c0_i32_0 = arith.constant 0 : i32
    return %arg0, %c0_i32 : i32, i32
  }
  func.func @transform_2(%arg0: i32) -> (i32, i32) {
    %c0_i32 = arith.constant 0 : i32
    %c0_i32_0 = arith.constant 0 : i32
    %c0_i32_1 = arith.constant 0 : i32
    return %c0_i32, %c0_i32_0 : i32, i32
  }
  func.func @transform_3(%arg0: i32) -> (i32, i32) {
    %c0_i32 = arith.constant 0 : i32
    %c0_i32_0 = arith.constant 0 : i32
    return %arg0, %c0_i32 : i32, i32
  }
}

</mosaic_0001>

<llo_original>
// kernel: tpu_custom_call.1
$region0: #{tpu_custom_call.1}
  #allocation0 [shape = 'u32[]', space=smem, size = 0x4, offset = 0x4, fixed_abs, tag = 'smem constant byte address 0x4 - core index']
  #allocation1 [shape = 'u32[144,128]{1,0:T(1,128)}', space=vmem, size = 0x12000, scoped, tag = 'internal scratch']
  %s0 = inlined_call_operand.vmem [shape: f32[32,384], index: 0, kind: input, shape index: {}]
  %s1 = inlined_call_operand.vmem [shape: f32[32,16], index: 1, kind: input, shape index: {}]
  %s2 = inlined_call_operand.vmem [shape: f32[384,16], index: 2, kind: input, shape index: {}]
  %s3 = inlined_call_operand.vmem [shape: f32[32,16], index: 3, kind: output, shape index: {}]
  %s4 = sld [smem:[#allocation0]]
  $region45: #{tpu_custom_call.1} parent=0
    _
  %s6 = ssub.s32 1, %s4
  %s7 = scalar_select 0, %s6, %s4
  loop: start=0, step=1, limit=6
  $region2: #{tpu_custom_call.1} parent=0 // loop_pre_header
    _
  $region3: #{tpu_custom_call.1} parent=0 // loop_header
    %s9 = sphi 0, %s13
    %p10 = scmp.ge.s32.totalorder %s9, 6
    %s19 = sphi 0, %s21
    %s22 = sphi 0, %s19
    %s23 = sphi 0, %s22
    %s39 = sphi 0, %s23
    %s45 = sphi 0, %s47
    %s48 = sphi 0, %s45
    %s49 = sphi 0, %s48
    %s65 = sphi 0, %s49
    %s69 = sphi 0, %s69
    %s71 = sphi 0, %s69
    %s72 = sphi 0, %s71
    %s86 = sphi 0, %s72
    %s92 = sphi 0, %s94
    %s95 = sphi 0, %s92
    %s96 = sphi 0, %s95
    %s112 = sphi 0, %s96
  $region4: #{tpu_custom_call.1} parent=0 // loop_header_branch
    %12 = sbr.rel (%p10) target = $region8
  $region5: #{tpu_custom_call.1} parent=0 // loop_body
    %s14 = ssub.s32 %s9, 1
    %s15 = ssub.s32 %s9, 2
    %s16 = sadd.s32 %s9, 1
    %s17 = ssub.s32 %s9, %s16
    %p18 = scmp.eq.s32.totalorder %s17, 0
    %s20 = sadd.s32 %s19, 1
    %s21 = scalar_select %p18, %s19, %s20
    %p24 = pneg %p18
    %p25 = scmp.eq.s32.totalorder %s9, 3
    %p26 = por %p24, %p25
    %p27 = scmp.ne.s32.totalorder %s19, %s22
    %p28 = scmp.eq.s32.totalorder %s9, 0
    %p29 = por %p27, %p28
    %p30 = scmp.ne.s32.totalorder %s19, %s22
    %p31 = scmp.eq.s32.totalorder %s14, 3
    %p32 = por %p30, %p31
    %p33 = scmp.ne.s32.totalorder %s22, %s23
    %p34 = scmp.eq.s32.totalorder %s14, 0
    %p35 = por %p33, %p34
    %p36 = scmp.ne.s32.totalorder %s22, %s23
    %p37 = scmp.eq.s32.totalorder %s15, 3
    %p38 = por %p36, %p37
    %p40 = scmp.ne.s32.totalorder %s23, %s39
    %p41 = scmp.eq.s32.totalorder %s15, 0
    %p42 = por %p40, %p41
    %s43 = ssub.s32 %s9, %s16
    %p44 = scmp.eq.s32.totalorder %s43, 0
    %s46 = sadd.s32 %s45, 1
    %s47 = scalar_select %p44, %s45, %s46
    %p50 = pneg %p44
    %p51 = scmp.eq.s32.totalorder %s9, 3
    %p52 = por %p50, %p51
    %p53 = scmp.ne.s32.totalorder %s45, %s48
    %p54 = scmp.eq.s32.totalorder %s9, 0
    %p55 = por %p53, %p54
    %p56 = scmp.ne.s32.totalorder %s45, %s48
    %p57 = scmp.eq.s32.totalorder %s14, 3
    %p58 = por %p56, %p57
    %p59 = scmp.ne.s32.totalorder %s48, %s49
    %p60 = scmp.eq.s32.totalorder %s14, 0
    %p61 = por %p59, %p60
    %p62 = scmp.ne.s32.totalorder %s48, %s49
    %p63 = scmp.eq.s32.totalorder %s15, 3
    %p64 = por %p62, %p63
    %p66 = scmp.ne.s32.totalorder %s49, %s65
    %p67 = scmp.eq.s32.totalorder %s15, 0
    %p68 = por %p66, %p67
    %s70 = sadd.s32 %s69, 1
    %p73 = scmp.eq.s32.totalorder %s9, 3
    %p74 = scmp.ne.s32.totalorder %s69, %s71
    %p75 = scmp.eq.s32.totalorder %s9, 0
    %p76 = por %p74, %p75
    %p77 = scmp.ne.s32.totalorder %s69, %s71
    %p78 = scmp.eq.s32.totalorder %s14, 3
    %p79 = por %p77, %p78
    %p80 = scmp.ne.s32.totalorder %s71, %s72
    %p81 = scmp.eq.s32.totalorder %s14, 0
    %p82 = por %p80, %p81
    %p83 = scmp.ne.s32.totalorder %s71, %s72
    %p84 = scmp.eq.s32.totalorder %s15, 3
    %p85 = por %p83, %p84
    %p87 = scmp.ne.s32.totalorder %s72, %s86
    %p88 = scmp.eq.s32.totalorder %s15, 0
    %p89 = por %p87, %p88
    %s90 = ssub.s32 %s9, %s16
    %p91 = scmp.eq.s32.totalorder %s90, 0
    %s93 = sadd.s32 %s92, 1
    %s94 = scalar_select %p91, %s92, %s93
    %p97 = pneg %p91
    %p98 = scmp.eq.s32.totalorder %s9, 3
    %p99 = por %p97, %p98
    %p100 = scmp.ne.s32.totalorder %s92, %s95
    %p101 = scmp.eq.s32.totalorder %s9, 0
    %p102 = por %p100, %p101
    %p103 = scmp.ne.s32.totalorder %s92, %s95
    %p104 = scmp.eq.s32.totalorder %s14, 3
    %p105 = por %p103, %p104
    %p106 = scmp.ne.s32.totalorder %s95, %s96
    %p107 = scmp.eq.s32.totalorder %s14, 0
    %p108 = por %p106, %p107
    %p109 = scmp.ne.s32.totalorder %s95, %s96
    %p110 = scmp.eq.s32.totalorder %s15, 3
    %p111 = por %p109, %p110
    %p113 = scmp.ne.s32.totalorder %s96, %s112
    %p114 = scmp.eq.s32.totalorder %s15, 0
    %p115 = por %p113, %p114
    %p116 = scmp.le.s32.totalorder 1, %s9
    %p117 = scmp.lt.s32.totalorder %s9, 5
    %p118 = pnand %p116, %p117
    %p119 = pneg %p118
    // Predicated region
    $region9: #{tpu_custom_call.1} parent=5 // pred_check
      _
    $region10: #{tpu_custom_call.1} parent=5 // pred_check_branch
      %121 = sbr.rel (%p118) target = $region12
    $region11: #{tpu_custom_call.1} parent=5 // pred_region
      %s122 = ssub.s32 %s9, 1
      // Predicated region
      $region13: #{tpu_custom_call.1} parent=11 // pred_check
        %p123 = pneg %p82
      $region14: #{tpu_custom_call.1} parent=11 // pred_check_branch
        %125 = sbr.rel (%p123) target = $region16
      $region15: #{tpu_custom_call.1} parent=11 // pred_region
        _
      $region16: #{tpu_custom_call.1} parent=11 // pred_fallthru
        _
    $region12: #{tpu_custom_call.1} parent=5 // pred_fallthru
      _
    %p126 = scmp.lt.s32.totalorder %s9, 4
    // Predicated region
    $region17: #{tpu_custom_call.1} parent=5 // pred_check
      %p127 = pneg %p126
    $region18: #{tpu_custom_call.1} parent=5 // pred_check_branch
      %129 = sbr.rel (%p127) target = $region20
    $region19: #{tpu_custom_call.1} parent=5 // pred_region
      // Predicated region
      $region21: #{tpu_custom_call.1} parent=19 // pred_check
        %p130 = pneg %p29
      $region22: #{tpu_custom_call.1} parent=19 // pred_check_branch
        %132 = sbr.rel (%p130) target = $region24
      $region23: #{tpu_custom_call.1} parent=19 // pred_region
        %p133 = scmp.lt.s32.totalorder %s9, 3
        %s134 = scalar_select %p133, %s9, 3
        %s135 = smul.addr %s134, 3
        %s136 = smul.addr %s135, 8
        %s137 = scalar_lea.vmem %s0, %s136
      $region24: #{tpu_custom_call.1} parent=19 // pred_fallthru
        _
      // Predicated region
      $region25: #{tpu_custom_call.1} parent=19 // pred_check
        %p138 = pneg %p55
      $region26: #{tpu_custom_call.1} parent=19 // pred_check_branch
        %140 = sbr.rel (%p138) target = $region28
      $region27: #{tpu_custom_call.1} parent=19 // pred_region
        %p141 = scmp.lt.s32.totalorder %s9, 3
        %s142 = scalar_select %p141, %s9, 3
        %s143 = smul.addr %s142, 8
        %s144 = scalar_lea.vmem %s1, %s143
      $region28: #{tpu_custom_call.1} parent=19 // pred_fallthru
        _
    $region20: #{tpu_custom_call.1} parent=5 // pred_fallthru
      _
    %p145 = scmp.le.s32.totalorder 1, %s9
    %p146 = scmp.lt.s32.totalorder %s9, 5
    %p147 = pnand %p145, %p146
    %p148 = pneg %p147
    // Predicated region
    $region29: #{tpu_custom_call.1} parent=5 // pred_check
      _
    $region30: #{tpu_custom_call.1} parent=5 // pred_check_branch
      %150 = sbr.rel (%p147) target = $region32
    $region31: #{tpu_custom_call.1} parent=5 // pred_region
      %s151 = ssub.s32 %s9, 1
      %p152 = scmp.lt.s32.totalorder %s14, 3
      %s153 = scalar_select %p152, %s14, 3
      %s154 = smul.addr %s153, 3
      %s155 = smul.addr %s154, 8
      %s156 = scalar_lea.vmem %s0, %s155
      %p157 = pneg %p35
      %p158 = pneg %p32
      %p159 = scmp.lt.s32.totalorder %s14, 3
      %s160 = scalar_select %p159, %s14, 3
      %s161 = smul.addr %s160, 8
      %s162 = scalar_lea.vmem %s1, %s161
      %p163 = pneg %p61
      %p164 = pneg %p58
      %p165 = pneg %p82
      %p166 = pneg %p79
      %p167 = pneg %p108
      %p168 = pneg %p105
      %p169 = scmp.lt.s32.totalorder %s14, 3
      %s170 = scalar_select %p169, %s14, 3
      %s171 = smul.addr %s170, 8
      %s172 = scalar_lea.vmem %s3, %s171
      %p173 = scmp.lt.s32.totalorder %s14, 3
      %s174 = scalar_select %p173, %s14, 3
      %s175 = smul.addr %s174, 3
      %s176 = smul.addr %s175, 8
      %s177 = scalar_lea.vmem %s0, %s176
      %p178 = scmp.lt.s32.totalorder %s14, 3
      %s179 = scalar_select %p178, %s14, 3
      %s180 = smul.addr %s179, 8
      %s181 = scalar_lea.vmem %s1, %s180
      %p182 = scmp.lt.s32.totalorder %s14, 3
      %s183 = scalar_select %p182, %s14, 3
      %s184 = smul.addr %s183, 8
      %s185 = scalar_lea.vmem %s3, %s184
      %v186 = vld [vmem:[%s177] sm:$0xff]
      %v187 = vld [vmem:[%s177 + $0x8] sm:$0xff]
      %v188 = vld [vmem:[%s177 + $0x10] sm:$0xff]
      %v189 = vmax.f32 %v186, 0.0
      %v190 = vmax.f32 %v187, 0.0
      %v191 = vmax.f32 %v188, 0.0
      %v192 = vand.u32 2147483647, %v186
      %v193 = vand.u32 2147483647, %v187
      %v194 = vand.u32 2147483647, %v188
      %v195 = vsub.f32 0.0, %v192
      %v196 = vsub.f32 0.0, %v193
      %v197 = vsub.f32 0.0, %v194
      %v198 = vmul.f32 %v195, 1.442695
      %v199 = vpow.pop %v198
      %v200 = vmul.f32 %v196, 1.442695
      %v201 = vpow.pop %v200
      %v202 = vmul.f32 %v197, 1.442695
      %v203 = vpow.pop %v202
      %v204 = vadd.f32 %v199, 1.0
      %v205 = vlog2.pop %v204
      %v206 = vmul.f32 %v205, 0.6931472
      %v207 = vmul.f32 -0.5, %v199
      %v208 = vadd.f32 %v207, 1.0
      %v209 = vmul.f32 %v208, %v199
      %v210 = vand.u32 2147483647, %v199
      %vm211 = vcmp.lt.f32.partialorder %v210, 0.0004427343
      %v212 = vsel %vm211, %v209, %v206
      %v213 = vadd.f32 %v201, 1.0
      %v214 = vlog2.pop %v213
      %v215 = vmul.f32 %v214, 0.6931472
      %v216 = vmul.f32 -0.5, %v201
      %v217 = vadd.f32 %v216, 1.0
      %v218 = vmul.f32 %v217, %v201
      %v219 = vand.u32 2147483647, %v201
      %vm220 = vcmp.lt.f32.partialorder %v219, 0.0004427343
      %v221 = vsel %vm220, %v218, %v215
      %v222 = vadd.f32 %v203, 1.0
      %v223 = vlog2.pop %v222
      %v224 = vmul.f32 %v223, 0.6931472
      %v225 = vmul.f32 -0.5, %v203
      %v226 = vadd.f32 %v225, 1.0
      %v227 = vmul.f32 %v226, %v203
      %v228 = vand.u32 2147483647, %v203
      %vm229 = vcmp.lt.f32.partialorder %v228, 0.0004427343
      %v230 = vsel %vm229, %v227, %v224
      %v231 = vadd.f32 %v189, %v212
      %v232 = vadd.f32 %v190, %v221
      %v233 = vadd.f32 %v191, %v230
      %v234 = vld [vmem:[%s2] sm:$0xff]
      %v235 = vld [vmem:[%s2 + $0x8] sm:$0xff]
      %v236 = vld [vmem:[%s2 + $0x10] sm:$0xff]
      %v237 = vld [vmem:[%s2 + $0x18] sm:$0xff]
      %v238 = vld [vmem:[%s2 + $0x20] sm:$0xff]
      %v239 = vld [vmem:[%s2 + $0x28] sm:$0xff]
      %v240 = vld [vmem:[%s2 + $0x30] sm:$0xff]
      %v241 = vld [vmem:[%s2 + $0x38] sm:$0xff]
      %v242 = vld [vmem:[%s2 + $0x40] sm:$0xff]
      %v243 = vld [vmem:[%s2 + $0x48] sm:$0xff]
      %v244 = vld [vmem:[%s2 + $0x50] sm:$0xff]
      %v245 = vld [vmem:[%s2 + $0x58] sm:$0xff]
      %v246 = vld [vmem:[%s2 + $0x60] sm:$0xff]
      %v247 = vld [vmem:[%s2 + $0x68] sm:$0xff]
      %v248 = vld [vmem:[%s2 + $0x70] sm:$0xff]
      %v249 = vld [vmem:[%s2 + $0x78] sm:$0xff]
      %v250 = vld [vmem:[%s2 + $0x80] sm:$0xff]
      %v251 = vld [vmem:[%s2 + $0x88] sm:$0xff]
      %v252 = vld [vmem:[%s2 + $0x90] sm:$0xff]
      %v253 = vld [vmem:[%s2 + $0x98] sm:$0xff]
      %v254 = vld [vmem:[%s2 + $0xa0] sm:$0xff]
      %v255 = vld [vmem:[%s2 + $0xa8] sm:$0xff]
      %v256 = vld [vmem:[%s2 + $0xb0] sm:$0xff]
      %v257 = vld [vmem:[%s2 + $0xb8] sm:$0xff]
      %v258 = vld [vmem:[%s2 + $0xc0] sm:$0xff]
      %v259 = vld [vmem:[%s2 + $0xc8] sm:$0xff]
      %v260 = vld [vmem:[%s2 + $0xd0] sm:$0xff]
      %v261 = vld [vmem:[%s2 + $0xd8] sm:$0xff]
      %v262 = vld [vmem:[%s2 + $0xe0] sm:$0xff]
      %v263 = vld [vmem:[%s2 + $0xe8] sm:$0xff]
      %v264 = vld [vmem:[%s2 + $0xf0] sm:$0xff]
      %v265 = vld [vmem:[%s2 + $0xf8] sm:$0xff]
      %v266 = vld [vmem:[%s2 + $0x100] sm:$0xff]
      %v267 = vld [vmem:[%s2 + $0x108] sm:$0xff]
      %v268 = vld [vmem:[%s2 + $0x110] sm:$0xff]
      %v269 = vld [vmem:[%s2 + $0x118] sm:$0xff]
      %v270 = vld [vmem:[%s2 + $0x120] sm:$0xff]
      %v271 = vld [vmem:[%s2 + $0x128] sm:$0xff]
      %v272 = vld [vmem:[%s2 + $0x130] sm:$0xff]
      %v273 = vld [vmem:[%s2 + $0x138] sm:$0xff]
      %v274 = vld [vmem:[%s2 + $0x140] sm:$0xff]
      %v275 = vld [vmem:[%s2 + $0x148] sm:$0xff]
      %v276 = vld [vmem:[%s2 + $0x150] sm:$0xff]
      %v277 = vld [vmem:[%s2 + $0x158] sm:$0xff]
      %v278 = vld [vmem:[%s2 + $0x160] sm:$0xff]
      %v279 = vld [vmem:[%s2 + $0x168] sm:$0xff]
      %v280 = vld [vmem:[%s2 + $0x170] sm:$0xff]
      %v281 = vld [vmem:[%s2 + $0x178] sm:$0xff]
      %282 = vmatprep.subr.mxu0 0.0
      %v283 = vand.u32 %v234, 4294901760
      %284 = vmatpush1.msra.mxu0 %v283
      %285 = vmatprep.subr.mxu0 0.0
      %v286 = vand.u32 %v235, 4294901760
      %287 = vmatpush1.msra.mxu0 %v286
      %288 = vmatprep.subr.mxu0 0.0
      %v289 = vand.u32 %v236, 4294901760
      %290 = vmatpush1.msra.mxu0 %v289
      %291 = vmatprep.subr.mxu0 0.0
      %v292 = vand.u32 %v237, 4294901760
      %293 = vmatpush1.msra.mxu0 %v292
      %294 = vmatprep.subr.mxu0 0.0
      %v295 = vand.u32 %v238, 4294901760
      %296 = vmatpush1.msra.mxu0 %v295
      %297 = vmatprep.subr.mxu0 0.0
      %v298 = vand.u32 %v239, 4294901760
      %299 = vmatpush1.msra.mxu0 %v298
      %300 = vmatprep.subr.mxu0 0.0
      %v301 = vand.u32 %v240, 4294901760
      %302 = vmatpush1.msra.mxu0 %v301
      %303 = vmatprep.subr.mxu0 0.0
      %v304 = vand.u32 %v241, 4294901760
      %305 = vmatpush1.msra.mxu0 %v304
      %306 = vmatprep.subr.mxu0 0.0
      %v307 = vand.u32 %v242, 4294901760
      %308 = vmatpush1.msra.mxu0 %v307
      %309 = vmatprep.subr.mxu0 0.0
      %v310 = vand.u32 %v243, 4294901760
      %311 = vmatpush1.msra.mxu0 %v310
      %312 = vmatprep.subr.mxu0 0.0
      %v313 = vand.u32 %v244, 4294901760
      %314 = vmatpush1.msra.mxu0 %v313
      %315 = vmatprep.subr.mxu0 0.0
      %v316 = vand.u32 %v245, 4294901760
      %317 = vmatpush1.msra.mxu0 %v316
      %318 = vmatprep.subr.mxu0 0.0
      %v319 = vand.u32 %v246, 4294901760
      %320 = vmatpush1.msra.mxu0 %v319
      %321 = vmatprep.subr.mxu0 0.0
      %v322 = vand.u32 %v247, 4294901760
      %323 = vmatpush1.msra.mxu0 %v322
      %324 = vmatprep.subr.mxu0 0.0
      %v325 = vand.u32 %v248, 4294901760
      %326 = vmatpush1.msra.mxu0 %v325
      %327 = vmatprep.subr.mxu0 0.0
      %v328 = vand.u32 %v249, 4294901760
      %329 = vmatpush1.msra.mxu0 %v328
      %330 = vmatprep.subr.mxu0 0.0
      %v331 = vand.u32 %v250, 4294901760
      %332 = vmatpush1.msra.mxu0 %v331
      %333 = vmatprep.subr.mxu0 0.0
      %v334 = vand.u32 %v251, 4294901760
      %335 = vmatpush1.msra.mxu0 %v334
      %336 = vmatprep.subr.mxu0 0.0
      %v337 = vand.u32 %v252, 4294901760
      %338 = vmatpush1.msra.mxu0 %v337
      %339 = vmatprep.subr.mxu0 0.0
      %v340 = vand.u32 %v253, 4294901760
      %341 = vmatpush1.msra.mxu0 %v340
      %342 = vmatprep.subr.mxu0 0.0
      %v343 = vand.u32 %v254, 4294901760
      %344 = vmatpush1.msra.mxu0 %v343
      %345 = vmatprep.subr.mxu0 0.0
      %v346 = vand.u32 %v255, 4294901760
      %347 = vmatpush1.msra.mxu0 %v346
      %348 = vmatprep.subr.mxu0 0.0
      %v349 = vand.u32 %v256, 4294901760
      %350 = vmatpush1.msra.mxu0 %v349
      %351 = vmatprep.subr.mxu0 0.0
      %v352 = vand.u32 %v257, 4294901760
      %353 = vmatpush1.msra.mxu0 %v352
      %354 = vmatprep.subr.mxu0 0.0
      %v355 = vand.u32 %v258, 4294901760
      %356 = vmatpush1.msra.mxu0 %v355
      %357 = vmatprep.subr.mxu0 0.0
      %v358 = vand.u32 %v259, 4294901760
      %359 = vmatpush1.msra.mxu0 %v358
      %360 = vmatprep.subr.mxu0 0.0
      %v361 = vand.u32 %v260, 4294901760
      %362 = vmatpush1.msra.mxu0 %v361
      %363 = vmatprep.subr.mxu0 0.0
      %v364 = vand.u32 %v261, 4294901760
      %365 = vmatpush1.msra.mxu0 %v364
      %366 = vmatprep.subr.mxu0 0.0
      %v367 = vand.u32 %v262, 4294901760
      %368 = vmatpush1.msra.mxu0 %v367
      %369 = vmatprep.subr.mxu0 0.0
      %v370 = vand.u32 %v263, 4294901760
      %371 = vmatpush1.msra.mxu0 %v370
      %372 = vmatprep.subr.mxu0 0.0
      %v373 = vand.u32 %v264, 4294901760
      %374 = vmatpush1.msra.mxu0 %v373
      %375 = vmatprep.subr.mxu0 0.0
      %v376 = vand.u32 %v265, 4294901760
      %377 = vmatpush1.msra.mxu0 %v376
      %v378 = vand.u32 %v232, 4294901760
      %v379 = vsub.f32 %v232, %v378
      %v380 = vand.u32 %v379, 4294901760
      %v381 = vsub.f32 %v379, %v380
      %v382 = vand.u32 %v381, 4294901760
      %383 = vmatprep.mubr.f32.mxu0 %v382
      %v384 = vand.u32 %v231, 4294901760
      %v385 = vsub.f32 %v231, %v384
      %v386 = vand.u32 %v385, 4294901760
      %v387 = vsub.f32 %v385, %v386
      %v388 = vand.u32 %v387, 4294901760
      %389 = vmatmul.mubr.f32.gmra.mrb[0].mxu0 %v388
      %v390 = vpop.f32.mrb[0].mxu0
      %v391 = vadd.f32 0.0, %v390
      %v392 = vpop.f32.mrb[0].mxu0
      %393 = vdwg.mxu0
      %394 = vmatprep.subr.mxu0 0.0
      %v395 = vand.u32 %v234, 4294901760
      %v396 = vsub.f32 %v234, %v395
      %v397 = vand.u32 %v396, 4294901760
      %v398 = vsub.f32 %v396, %v397
      %v399 = vand.u32 %v398, 4294901760
      %400 = vmatpush1.msra.mxu0 %v399
      %401 = vmatprep.subr.mxu0 0.0
      %v402 = vand.u32 %v235, 4294901760
      %v403 = vsub.f32 %v235, %v402
      %v404 = vand.u32 %v403, 4294901760
      %v405 = vsub.f32 %v403, %v404
      %v406 = vand.u32 %v405, 4294901760
      %407 = vmatpush1.msra.mxu0 %v406
      %408 = vmatprep.subr.mxu0 0.0
      %v409 = vand.u32 %v236, 4294901760
      %v410 = vsub.f32 %v236, %v409
      %v411 = vand.u32 %v410, 4294901760
      %v412 = vsub.f32 %v410, %v411
      %v413 = vand.u32 %v412, 4294901760
      %414 = vmatpush1.msra.mxu0 %v413
      %415 = vmatprep.subr.mxu0 0.0
      %v416 = vand.u32 %v237, 4294901760
      %v417 = vsub.f32 %v237, %v416
      %v418 = vand.u32 %v417, 4294901760
      %v419 = vsub.f32 %v417, %v418
      %v420 = vand.u32 %v419, 4294901760
      %421 = vmatpush1.msra.mxu0 %v420
      %422 = vmatprep.subr.mxu0 0.0
      %v423 = vand.u32 %v238, 4294901760
      %v424 = vsub.f32 %v238, %v423
      %v425 = vand.u32 %v424, 4294901760
      %v426 = vsub.f32 %v424, %v425
      %v427 = vand.u32 %v426, 4294901760
      %428 = vmatpush1.msra.mxu0 %v427
      %429 = vmatprep.subr.mxu0 0.0
      %v430 = vand.u32 %v239, 4294901760
      %v431 = vsub.f32 %v239, %v430
      %v432 = vand.u32 %v431, 4294901760
      %v433 = vsub.f32 %v431, %v432
      %v434 = vand.u32 %v433, 4294901760
      %435 = vmatpush1.msra.mxu0 %v434
      %436 = vmatprep.subr.mxu0 0.0
      %v437 = vand.u32 %v240, 4294901760
      %v438 = vsub.f32 %v240, %v437
      %v439 = vand.u32 %v438, 4294901760
      %v440 = vsub.f32 %v438, %v439
      %v441 = vand.u32 %v440, 4294901760
      %442 = vmatpush1.msra.mxu0 %v441
      %443 = vmatprep.subr.mxu0 0.0
      %v444 = vand.u32 %v241, 4294901760
      %v445 = vsub.f32 %v241, %v444
      %v446 = vand.u32 %v445, 4294901760
      %v447 = vsub.f32 %v445, %v446
      %v448 = vand.u32 %v447, 4294901760
      %449 = vmatpush1.msra.mxu0 %v448
      %450 = vmatprep.subr.mxu0 0.0
      %v451 = vand.u32 %v242, 4294901760
      %v452 = vsub.f32 %v242, %v451
      %v453 = vand.u32 %v452, 4294901760
      %v454 = vsub.f32 %v452, %v453
      %v455 = vand.u32 %v454, 4294901760
      %456 = vmatpush1.msra.mxu0 %v455
      %457 = vmatprep.subr.mxu0 0.0
      %v458 = vand.u32 %v243, 4294901760
      %v459 = vsub.f32 %v243, %v458
      %v460 = vand.u32 %v459, 4294901760
      %v461 = vsub.f32 %v459, %v460
      %v462 = vand.u32 %v461, 4294901760
      %463 = vmatpush1.msra.mxu0 %v462
      %464 = vmatprep.subr.mxu0 0.0
      %v465 = vand.u32 %v244, 4294901760
      %v466 = vsub.f32 %v244, %v465
      %v467 = vand.u32 %v466, 4294901760
      %v468 = vsub.f32 %v466, %v467
      %v469 = vand.u32 %v468, 4294901760
      %470 = vmatpush1.msra.mxu0 %v469
      %471 = vmatprep.subr.mxu0 0.0
      %v472 = vand.u32 %v245, 4294901760
      %v473 = vsub.f32 %v245, %v472
      %v474 = vand.u32 %v473, 4294901760
      %v475 = vsub.f32 %v473, %v474
      %v476 = vand.u32 %v475, 4294901760
      %477 = vmatpush1.msra.mxu0 %v476
      %478 = vmatprep.subr.mxu0 0.0
      %v479 = vand.u32 %v246, 4294901760
      %v480 = vsub.f32 %v246, %v479
      %v481 = vand.u32 %v480, 4294901760
      %v482 = vsub.f32 %v480, %v481
      %v483 = vand.u32 %v482, 4294901760
      %484 = vmatpush1.msra.mxu0 %v483
      %485 = vmatprep.subr.mxu0 0.0
      %v486 = vand.u32 %v247, 4294901760
      %v487 = vsub.f32 %v247, %v486
      %v488 = vand.u32 %v487, 4294901760
      %v489 = vsub.f32 %v487, %v488
      %v490 = vand.u32 %v489, 4294901760
      %491 = vmatpush1.msra.mxu0 %v490
      %492 = vmatprep.subr.mxu0 0.0
      %v493 = vand.u32 %v248, 4294901760
      %v494 = vsub.f32 %v248, %v493
      %v495 = vand.u32 %v494, 4294901760
      %v496 = vsub.f32 %v494, %v495
      %v497 = vand.u32 %v496, 4294901760
      %498 = vmatpush1.msra.mxu0 %v497
      %499 = vmatprep.subr.mxu0 0.0
      %v500 = vand.u32 %v249, 4294901760
      %v501 = vsub.f32 %v249, %v500
      %v502 = vand.u32 %v501, 4294901760
      %v503 = vsub.f32 %v501, %v502
      %v504 = vand.u32 %v503, 4294901760
      %505 = vmatpush1.msra.mxu0 %v504
      %506 = vmatprep.subr.mxu0 0.0
      %v507 = vand.u32 %v250, 4294901760
      %v508 = vsub.f32 %v250, %v507
      %v509 = vand.u32 %v508, 4294901760
      %v510 = vsub.f32 %v508, %v509
      %v511 = vand.u32 %v510, 4294901760
      %512 = vmatpush1.msra.mxu0 %v511
      %513 = vmatprep.subr.mxu0 0.0
      %v514 = vand.u32 %v251, 4294901760
      %v515 = vsub.f32 %v251, %v514
      %v516 = vand.u32 %v515, 4294901760
      %v517 = vsub.f32 %v515, %v516
      %v518 = vand.u32 %v517, 4294901760
      %519 = vmatpush1.msra.mxu0 %v518
      %520 = vmatprep.subr.mxu0 0.0
      %v521 = vand.u32 %v252, 4294901760
      %v522 = vsub.f32 %v252, %v521
      %v523 = vand.u32 %v522, 4294901760
      %v524 = vsub.f32 %v522, %v523
      %v525 = vand.u32 %v524, 4294901760
      %526 = vmatpush1.msra.mxu0 %v525
      %527 = vmatprep.subr.mxu0 0.0
      %v528 = vand.u32 %v253, 4294901760
      %v529 = vsub.f32 %v253, %v528
      %v530 = vand.u32 %v529, 4294901760
      %v531 = vsub.f32 %v529, %v530
      %v532 = vand.u32 %v531, 4294901760
      %533 = vmatpush1.msra.mxu0 %v532
      %534 = vmatprep.subr.mxu0 0.0
      %v535 = vand.u32 %v254, 4294901760
      %v536 = vsub.f32 %v254, %v535
      %v537 = vand.u32 %v536, 4294901760
      %v538 = vsub.f32 %v536, %v537
      %v539 = vand.u32 %v538, 4294901760
      %540 = vmatpush1.msra.mxu0 %v539
      %541 = vmatprep.subr.mxu0 0.0
      %v542 = vand.u32 %v255, 4294901760
      %v543 = vsub.f32 %v255, %v542
      %v544 = vand.u32 %v543, 4294901760
      %v545 = vsub.f32 %v543, %v544
      %v546 = vand.u32 %v545, 4294901760
      %547 = vmatpush1.msra.mxu0 %v546
      %548 = vmatprep.subr.mxu0 0.0
      %v549 = vand.u32 %v256, 4294901760
      %v550 = vsub.f32 %v256, %v549
      %v551 = vand.u32 %v550, 4294901760
      %v552 = vsub.f32 %v550, %v551
      %v553 = vand.u32 %v552, 4294901760
      %554 = vmatpush1.msra.mxu0 %v553
      %555 = vmatprep.subr.mxu0 0.0
      %v556 = vand.u32 %v257, 4294901760
      %v557 = vsub.f32 %v257, %v556
      %v558 = vand.u32 %v557, 4294901760
      %v559 = vsub.f32 %v557, %v558
      %v560 = vand.u32 %v559, 4294901760
      %561 = vmatpush1.msra.mxu0 %v560
      %562 = vmatprep.subr.mxu0 0.0
      %v563 = vand.u32 %v258, 4294901760
      %v564 = vsub.f32 %v258, %v563
      %v565 = vand.u32 %v564, 4294901760
      %v566 = vsub.f32 %v564, %v565
      %v567 = vand.u32 %v566, 4294901760
      %568 = vmatpush1.msra.mxu0 %v567
      %569 = vmatprep.subr.mxu0 0.0
      %v570 = vand.u32 %v259, 4294901760
      %v571 = vsub.f32 %v259, %v570
      %v572 = vand.u32 %v571, 4294901760
      %v573 = vsub.f32 %v571, %v572
      %v574 = vand.u32 %v573, 4294901760
      %575 = vmatpush1.msra.mxu0 %v574
      %576 = vmatprep.subr.mxu0 0.0
      %v577 = vand.u32 %v260, 4294901760
      %v578 = vsub.f32 %v260, %v577
      %v579 = vand.u32 %v578, 4294901760
      %v580 = vsub.f32 %v578, %v579
      %v581 = vand.u32 %v580, 4294901760
      %582 = vmatpush1.msra.mxu0 %v581
      %583 = vmatprep.subr.mxu0 0.0
      %v584 = vand.u32 %v261, 4294901760
      %v585 = vsub.f32 %v261, %v584
      %v586 = vand.u32 %v585, 4294901760
      %v587 = vsub.f32 %v585, %v586
      %v588 = vand.u32 %v587, 4294901760
      %589 = vmatpush1.msra.mxu0 %v588
      %590 = vmatprep.subr.mxu0 0.0
      %v591 = vand.u32 %v262, 4294901760
      %v592 = vsub.f32 %v262, %v591
      %v593 = vand.u32 %v592, 4294901760
      %v594 = vsub.f32 %v592, %v593
      %v595 = vand.u32 %v594, 4294901760
      %596 = vmatpush1.msra.mxu0 %v595
      %597 = vmatprep.subr.mxu0 0.0
      %v598 = vand.u32 %v263, 4294901760
      %v599 = vsub.f32 %v263, %v598
      %v600 = vand.u32 %v599, 4294901760
      %v601 = vsub.f32 %v599, %v600
      %v602 = vand.u32 %v601, 4294901760
      %603 = vmatpush1.msra.mxu0 %v602
      %604 = vmatprep.subr.mxu0 0.0
      %v605 = vand.u32 %v264, 4294901760
      %v606 = vsub.f32 %v264, %v605
      %v607 = vand.u32 %v606, 4294901760
      %v608 = vsub.f32 %v606, %v607
      %v609 = vand.u32 %v608, 4294901760
      %610 = vmatpush1.msra.mxu0 %v609
      %611 = vmatprep.subr.mxu0 0.0
      %v612 = vand.u32 %v265, 4294901760
      %v613 = vsub.f32 %v265, %v612
      %v614 = vand.u32 %v613, 4294901760
      %v615 = vsub.f32 %v613, %v614
      %v616 = vand.u32 %v615, 4294901760
      %617 = vmatpush1.msra.mxu0 %v616
      %v618 = vand.u32 %v232, 4294901760
      %619 = vmatprep.mubr.f32.mxu0 %v618
      %v620 = vand.u32 %v231, 4294901760
      %621 = vmatmul.mubr.f32.gmra.mrb[0].mxu0 %v620
      %v622 = vpop.f32.mrb[0].mxu0
      %v623 = vadd.f32 %v391, %v622
      %v624 = vpop.f32.mrb[0].mxu0
      %625 = vdwg.mxu0
      %626 = vmatprep.subr.mxu0 0.0
      %v627 = vand.u32 %v234, 4294901760
      %v628 = vsub.f32 %v234, %v627
      %629 = vmatpush1.msra.mxu0 %v628
      %630 = vmatprep.subr.mxu0 0.0
      %v631 = vand.u32 %v235, 4294901760
      %v632 = vsub.f32 %v235, %v631
      %633 = vmatpush1.msra.mxu0 %v632
      %634 = vmatprep.subr.mxu0 0.0
      %v635 = vand.u32 %v236, 4294901760
      %v636 = vsub.f32 %v236, %v635
      %637 = vmatpush1.msra.mxu0 %v636
      %638 = vmatprep.subr.mxu0 0.0
      %v639 = vand.u32 %v237, 4294901760
      %v640 = vsub.f32 %v237, %v639
      %641 = vmatpush1.msra.mxu0 %v640
      %642 = vmatprep.subr.mxu0 0.0
      %v643 = vand.u32 %v238, 4294901760
      %v644 = vsub.f32 %v238, %v643
      %645 = vmatpush1.msra.mxu0 %v644
      %646 = vmatprep.subr.mxu0 0.0
      %v647 = vand.u32 %v239, 4294901760
      %v648 = vsub.f32 %v239, %v647
      %649 = vmatpush1.msra.mxu0 %v648
      %650 = vmatprep.subr.mxu0 0.0
      %v651 = vand.u32 %v240, 4294901760
      %v652 = vsub.f32 %v240, %v651
      %653 = vmatpush1.msra.mxu0 %v652
      %654 = vmatprep.subr.mxu0 0.0
      %v655 = vand.u32 %v241, 4294901760
      %v656 = vsub.f32 %v241, %v655
      %657 = vmatpush1.msra.mxu0 %v656
      %658 = vmatprep.subr.mxu0 0.0
      %v659 = vand.u32 %v242, 4294901760
      %v660 = vsub.f32 %v242, %v659
      %661 = vmatpush1.msra.mxu0 %v660
      %662 = vmatprep.subr.mxu0 0.0
      %v663 = vand.u32 %v243, 4294901760
      %v664 = vsub.f32 %v243, %v663
      %665 = vmatpush1.msra.mxu0 %v664
      %666 = vmatprep.subr.mxu0 0.0
      %v667 = vand.u32 %v244, 4294901760
      %v668 = vsub.f32 %v244, %v667
      %669 = vmatpush1.msra.mxu0 %v668
      %670 = vmatprep.subr.mxu0 0.0
      %v671 = vand.u32 %v245, 4294901760
      %v672 = vsub.f32 %v245, %v671
      %673 = vmatpush1.msra.mxu0 %v672
      %674 = vmatprep.subr.mxu0 0.0
      %v675 = vand.u32 %v246, 4294901760
      %v676 = vsub.f32 %v246, %v675
      %677 = vmatpush1.msra.mxu0 %v676
      %678 = vmatprep.subr.mxu0 0.0
      %v679 = vand.u32 %v247, 4294901760
      %v680 = vsub.f32 %v247, %v679
      %681 = vmatpush1.msra.mxu0 %v680
      %682 = vmatprep.subr.mxu0 0.0
      %v683 = vand.u32 %v248, 4294901760
      %v684 = vsub.f32 %v248, %v683
      %685 = vmatpush1.msra.mxu0 %v684
      %686 = vmatprep.subr.mxu0 0.0
      %v687 = vand.u32 %v249, 4294901760
      %v688 = vsub.f32 %v249, %v687
      %689 = vmatpush1.msra.mxu0 %v688
      %690 = vmatprep.subr.mxu0 0.0
      %v691 = vand.u32 %v250, 4294901760
      %v692 = vsub.f32 %v250, %v691
      %693 = vmatpush1.msra.mxu0 %v692
      %694 = vmatprep.subr.mxu0 0.0
      %v695 = vand.u32 %v251, 4294901760
      %v696 = vsub.f32 %v251, %v695
      %697 = vmatpush1.msra.mxu0 %v696
      %698 = vmatprep.subr.mxu0 0.0
      %v699 = vand.u32 %v252, 4294901760
      %v700 = vsub.f32 %v252, %v699
      %701 = vmatpush1.msra.mxu0 %v700
      %702 = vmatprep.subr.mxu0 0.0
      %v703 = vand.u32 %v253, 4294901760
      %v704 = vsub.f32 %v253, %v703
      %705 = vmatpush1.msra.mxu0 %v704
      %706 = vmatprep.subr.mxu0 0.0
      %v707 = vand.u32 %v254, 4294901760
      %v708 = vsub.f32 %v254, %v707
      %709 = vmatpush1.msra.mxu0 %v708
      %710 = vmatprep.subr.mxu0 0.0
      %v711 = vand.u32 %v255, 4294901760
      %v712 = vsub.f32 %v255, %v711
      %713 = vmatpush1.msra.mxu0 %v712
      %714 = vmatprep.subr.mxu0 0.0
      %v715 = vand.u32 %v256, 4294901760
      %v716 = vsub.f32 %v256, %v715
      %717 = vmatpush1.msra.mxu0 %v716
      %718 = vmatprep.subr.mxu0 0.0
      %v719 = vand.u32 %v257, 4294901760
      %v720 = vsub.f32 %v257, %v719
      %721 = vmatpush1.msra.mxu0 %v720
      %722 = vmatprep.subr.mxu0 0.0
      %v723 = vand.u32 %v258, 4294901760
      %v724 = vsub.f32 %v258, %v723
      %725 = vmatpush1.msra.mxu0 %v724
      %726 = vmatprep.subr.mxu0 0.0
      %v727 = vand.u32 %v259, 4294901760
      %v728 = vsub.f32 %v259, %v727
      %729 = vmatpush1.msra.mxu0 %v728
      %730 = vmatprep.subr.mxu0 0.0
      %v731 = vand.u32 %v260, 4294901760
      %v732 = vsub.f32 %v260, %v731
      %733 = vmatpush1.msra.mxu0 %v732
      %734 = vmatprep.subr.mxu0 0.0
      %v735 = vand.u32 %v261, 4294901760
      %v736 = vsub.f32 %v261, %v735
      %737 = vmatpush1.msra.mxu0 %v736
      %738 = vmatprep.subr.mxu0 0.0
      %v739 = vand.u32 %v262, 4294901760
      %v740 = vsub.f32 %v262, %v739
      %741 = vmatpush1.msra.mxu0 %v740
      %742 = vmatprep.subr.mxu0 0.0
      %v743 = vand.u32 %v263, 4294901760
      %v744 = vsub.f32 %v263, %v743
      %745 = vmatpush1.msra.mxu0 %v744
      %746 = vmatprep.subr.mxu0 0.0
      %v747 = vand.u32 %v264, 4294901760
      %v748 = vsub.f32 %v264, %v747
      %749 = vmatpush1.msra.mxu0 %v748
      %750 = vmatprep.subr.mxu0 0.0
      %v751 = vand.u32 %v265, 4294901760
      %v752 = vsub.f32 %v265, %v751
      %753 = vmatpush1.msra.mxu0 %v752
      %v754 = vand.u32 %v232, 4294901760
      %v755 = vsub.f32 %v232, %v754
      %756 = vmatprep.mubr.f32.mxu0 %v755
      %v757 = vand.u32 %v231, 4294901760
      %v758 = vsub.f32 %v231, %v757
      %759 = vmatmul.mubr.f32.gmra.mrb[0].mxu0 %v758
      %v760 = vpop.f32.mrb[0].mxu0
      %v761 = vadd.f32 %v623, %v760
      %v762 = vpop.f32.mrb[0].mxu0
      %763 = vdwg.mxu0
      %764 = vmatprep.subr.mxu0 0.0
      %v765 = vand.u32 %v234, 4294901760
      %766 = vmatpush1.msra.mxu0 %v765
      %767 = vmatprep.subr.mxu0 0.0
      %v768 = vand.u32 %v235, 4294901760
      %769 = vmatpush1.msra.mxu0 %v768
      %770 = vmatprep.subr.mxu0 0.0
      %v771 = vand.u32 %v236, 4294901760
      %772 = vmatpush1.msra.mxu0 %v771
      %773 = vmatprep.subr.mxu0 0.0
      %v774 = vand.u32 %v237, 4294901760
      %775 = vmatpush1.msra.mxu0 %v774
      %776 = vmatprep.subr.mxu0 0.0
      %v777 = vand.u32 %v238, 4294901760
      %778 = vmatpush1.msra.mxu0 %v777
      %779 = vmatprep.subr.mxu0 0.0
      %v780 = vand.u32 %v239, 4294901760
      %781 = vmatpush1.msra.mxu0 %v780
      %782 = vmatprep.subr.mxu0 0.0
      %v783 = vand.u32 %v240, 4294901760
      %784 = vmatpush1.msra.mxu0 %v783
      %785 = vmatprep.subr.mxu0 0.0
      %v786 = vand.u32 %v241, 4294901760
      %787 = vmatpush1.msra.mxu0 %v786
      %788 = vmatprep.subr.mxu0 0.0
      %v789 = vand.u32 %v242, 4294901760
      %790 = vmatpush1.msra.mxu0 %v789
      %791 = vmatprep.subr.mxu0 0.0
      %v792 = vand.u32 %v243, 4294901760
      %793 = vmatpush1.msra.mxu0 %v792
      %794 = vmatprep.subr.mxu0 0.0
      %v795 = vand.u32 %v244, 4294901760
      %796 = vmatpush1.msra.mxu0 %v795
      %797 = vmatprep.subr.mxu0 0.0
      %v798 = vand.u32 %v245, 4294901760
      %799 = vmatpush1.msra.mxu0 %v798
      %800 = vmatprep.subr.mxu0 0.0
      %v801 = vand.u32 %v246, 4294901760
      %802 = vmatpush1.msra.mxu0 %v801
      %803 = vmatprep.subr.mxu0 0.0
      %v804 = vand.u32 %v247, 4294901760
      %805 = vmatpush1.msra.mxu0 %v804
      %806 = vmatprep.subr.mxu0 0.0
      %v807 = vand.u32 %v248, 4294901760
      %808 = vmatpush1.msra.mxu0 %v807
      %809 = vmatprep.subr.mxu0 0.0
      %v810 = vand.u32 %v249, 4294901760
      %811 = vmatpush1.msra.mxu0 %v810
      %812 = vmatprep.subr.mxu0 0.0
      %v813 = vand.u32 %v250, 4294901760
      %814 = vmatpush1.msra.mxu0 %v813
      %815 = vmatprep.subr.mxu0 0.0
      %v816 = vand.u32 %v251, 4294901760
      %817 = vmatpush1.msra.mxu0 %v816
      %818 = vmatprep.subr.mxu0 0.0
      %v819 = vand.u32 %v252, 4294901760
      %820 = vmatpush1.msra.mxu0 %v819
      %821 = vmatprep.subr.mxu0 0.0
      %v822 = vand.u32 %v253, 4294901760
      %823 = vmatpush1.msra.mxu0 %v822
      %824 = vmatprep.subr.mxu0 0.0
      %v825 = vand.u32 %v254, 4294901760
      %826 = vmatpush1.msra.mxu0 %v825
      %827 = vmatprep.subr.mxu0 0.0
      %v828 = vand.u32 %v255, 4294901760
      %829 = vmatpush1.msra.mxu0 %v828
      %830 = vmatprep.subr.mxu0 0.0
      %v831 = vand.u32 %v256, 4294901760
      %832 = vmatpush1.msra.mxu0 %v831
      %833 = vmatprep.subr.mxu0 0.0
      %v834 = vand.u32 %v257, 4294901760
      %835 = vmatpush1.msra.mxu0 %v834
      %836 = vmatprep.subr.mxu0 0.0
      %v837 = vand.u32 %v258, 4294901760
      %838 = vmatpush1.msra.mxu0 %v837
      %839 = vmatprep.subr.mxu0 0.0
      %v840 = vand.u32 %v259, 4294901760
      %841 = vmatpush1.msra.mxu0 %v840
      %842 = vmatprep.subr.mxu0 0.0
      %v843 = vand.u32 %v260, 4294901760
      %844 = vmatpush1.msra.mxu0 %v843
      %845 = vmatprep.subr.mxu0 0.0
      %v846 = vand.u32 %v261, 4294901760
      %847 = vmatpush1.msra.mxu0 %v846
      %848 = vmatprep.subr.mxu0 0.0
      %v849 = vand.u32 %v262, 4294901760
      %850 = vmatpush1.msra.mxu0 %v849
      %851 = vmatprep.subr.mxu0 0.0
      %v852 = vand.u32 %v263, 4294901760
      %853 = vmatpush1.msra.mxu0 %v852
      %854 = vmatprep.subr.mxu0 0.0
      %v855 = vand.u32 %v264, 4294901760
      %856 = vmatpush1.msra.mxu0 %v855
      %857 = vmatprep.subr.mxu0 0.0
      %v858 = vand.u32 %v265, 4294901760
      %859 = vmatpush1.msra.mxu0 %v858
      %v860 = vand.u32 %v232, 4294901760
      %v861 = vsub.f32 %v232, %v860
      %v862 = vand.u32 %v861, 4294901760
      %863 = vmatprep.mubr.f32.mxu0 %v862
      %v864 = vand.u32 %v231, 4294901760
      %v865 = vsub.f32 %v231, %v864
      %v866 = vand.u32 %v865, 4294901760
      %867 = vmatmul.mubr.f32.gmra.mrb[0].mxu0 %v866
      %v868 = vpop.f32.mrb[0].mxu0
      %v869 = vadd.f32 %v761, %v868
      %v870 = vpop.f32.mrb[0].mxu0
      %871 = vdwg.mxu0
      %872 = vmatprep.subr.mxu0 0.0
      %v873 = vand.u32 %v234, 4294901760
      %v874 = vsub.f32 %v234, %v873
      %v875 = vand.u32 %v874, 4294901760
      %876 = vmatpush1.msra.mxu0 %v875
      %877 = vmatprep.subr.mxu0 0.0
      %v878 = vand.u32 %v235, 4294901760
      %v879 = vsub.f32 %v235, %v878
      %v880 = vand.u32 %v879, 4294901760
      %881 = vmatpush1.msra.mxu0 %v880
      %882 = vmatprep.subr.mxu0 0.0
      %v883 = vand.u32 %v236, 4294901760
      %v884 = vsub.f32 %v236, %v883
      %v885 = vand.u32 %v884, 4294901760
      %886 = vmatpush1.msra.mxu0 %v885
      %887 = vmatprep.subr.mxu0 0.0
      %v888 = vand.u32 %v237, 4294901760
      %v889 = vsub.f32 %v237, %v888
      %v890 = vand.u32 %v889, 4294901760
      %891 = vmatpush1.msra.mxu0 %v890
      %892 = vmatprep.subr.mxu0 0.0
      %v893 = vand.u32 %v238, 4294901760
      %v894 = vsub.f32 %v238, %v893
      %v895 = vand.u32 %v894, 4294901760
      %896 = vmatpush1.msra.mxu0 %v895
      %897 = vmatprep.subr.mxu0 0.0
      %v898 = vand.u32 %v239, 4294901760
      %v899 = vsub.f32 %v239, %v898
      %v900 = vand.u32 %v899, 4294901760
      %901 = vmatpush1.msra.mxu0 %v900
      %902 = vmatprep.subr.mxu0 0.0
      %v903 = vand.u32 %v240, 4294901760
      %v904 = vsub.f32 %v240, %v903
      %v905 = vand.u32 %v904, 4294901760
      %906 = vmatpush1.msra.mxu0 %v905
      %907 = vmatprep.subr.mxu0 0.0
      %v908 = vand.u32 %v241, 4294901760
      %v909 = vsub.f32 %v241, %v908
      %v910 = vand.u32 %v909, 4294901760
      %911 = vmatpush1.msra.mxu0 %v910
      %912 = vmatprep.subr.mxu0 0.0
      %v913 = vand.u32 %v242, 4294901760
      %v914 = vsub.f32 %v242, %v913
      %v915 = vand.u32 %v914, 4294901760
      %916 = vmatpush1.msra.mxu0 %v915
      %917 = vmatprep.subr.mxu0 0.0
      %v918 = vand.u32 %v243, 4294901760
      %v919 = vsub.f32 %v243, %v918
      %v920 = vand.u32 %v919, 4294901760
      %921 = vmatpush1.msra.mxu0 %v920
      %922 = vmatprep.subr.mxu0 0.0
      %v923 = vand.u32 %v244, 4294901760
      %v924 = vsub.f32 %v244, %v923
      %v925 = vand.u32 %v924, 4294901760
      %926 = vmatpush1.msra.mxu0 %v925
      %927 = vmatprep.subr.mxu0 0.0
      %v928 = vand.u32 %v245, 4294901760
      %v929 = vsub.f32 %v245, %v928
      %v930 = vand.u32 %v929, 4294901760
      %931 = vmatpush1.msra.mxu0 %v930
      %932 = vmatprep.subr.mxu0 0.0
      %v933 = vand.u32 %v246, 4294901760
      %v934 = vsub.f32 %v246, %v933
      %v935 = vand.u32 %v934, 4294901760
      %936 = vmatpush1.msra.mxu0 %v935
      %937 = vmatprep.subr.mxu0 0.0
      %v938 = vand.u32 %v247, 4294901760
      %v939 = vsub.f32 %v247, %v938
      %v940 = vand.u32 %v939, 4294901760
      %941 = vmatpush1.msra.mxu0 %v940
      %942 = vmatprep.subr.mxu0 0.0
      %v943 = vand.u32 %v248, 4294901760
      %v944 = vsub.f32 %v248, %v943
      %v945 = vand.u32 %v944, 4294901760
      %946 = vmatpush1.msra.mxu0 %v945
      %947 = vmatprep.subr.mxu0 0.0
      %v948 = vand.u32 %v249, 4294901760
      %v949 = vsub.f32 %v249, %v948
      %v950 = vand.u32 %v949, 4294901760
      %951 = vmatpush1.msra.mxu0 %v950
      %952 = vmatprep.subr.mxu0 0.0
      %v953 = vand.u32 %v250, 4294901760
      %v954 = vsub.f32 %v250, %v953
      %v955 = vand.u32 %v954, 4294901760
      %956 = vmatpush1.msra.mxu0 %v955
      %957 = vmatprep.subr.mxu0 0.0
      %v958 = vand.u32 %v251, 4294901760
      %v959 = vsub.f32 %v251, %v958
      %v960 = vand.u32 %v959, 4294901760
      %961 = vmatpush1.msra.mxu0 %v960
      %962 = vmatprep.subr.mxu0 0.0
      %v963 = vand.u32 %v252, 4294901760
      %v964 = vsub.f32 %v252, %v963
      %v965 = vand.u32 %v964, 4294901760
      %966 = vmatpush1.msra.mxu0 %v965
      %967 = vmatprep.subr.mxu0 0.0
      %v968 = vand.u32 %v253, 4294901760
      %v969 = vsub.f32 %v253, %v968
      %v970 = vand.u32 %v969, 4294901760
      %971 = vmatpush1.msra.mxu0 %v970
      %972 = vmatprep.subr.mxu0 0.0
      %v973 = vand.u32 %v254, 4294901760
      %v974 = vsub.f32 %v254, %v973
      %v975 = vand.u32 %v974, 4294901760
      %976 = vmatpush1.msra.mxu0 %v975
      %977 = vmatprep.subr.mxu0 0.0
      %v978 = vand.u32 %v255, 4294901760
      %v979 = vsub.f32 %v255, %v978
      %v980 = vand.u32 %v979, 4294901760
      %981 = vmatpush1.msra.mxu0 %v980
      %982 = vmatprep.subr.mxu0 0.0
      %v983 = vand.u32 %v256, 4294901760
      %v984 = vsub.f32 %v256, %v983
      %v985 = vand.u32 %v984, 4294901760
      %986 = vmatpush1.msra.mxu0 %v985
      %987 = vmatprep.subr.mxu0 0.0
      %v988 = vand.u32 %v257, 4294901760
      %v989 = vsub.f32 %v257, %v988
      %v990 = vand.u32 %v989, 4294901760
      %991 = vmatpush1.msra.mxu0 %v990
      %992 = vmatprep.subr.mxu0 0.0
      %v993 = vand.u32 %v258, 4294901760
      %v994 = vsub.f32 %v258, %v993
      %v995 = vand.u32 %v994, 4294901760
      %996 = vmatpush1.msra.mxu0 %v995
      %997 = vmatprep.subr.mxu0 0.0
      %v998 = vand.u32 %v259, 4294901760
      %v999 = vsub.f32 %v259, %v998
      %v1000 = vand.u32 %v999, 4294901760
      %1001 = vmatpush1.msra.mxu0 %v1000
      %1002 = vmatprep.subr.mxu0 0.0
      %v1003 = vand.u32 %v260, 4294901760
      %v1004 = vsub.f32 %v260, %v1003
      %v1005 = vand.u32 %v1004, 4294901760
      %1006 = vmatpush1.msra.mxu0 %v1005
      %1007 = vmatprep.subr.mxu0 0.0
      %v1008 = vand.u32 %v261, 4294901760
      %v1009 = vsub.f32 %v261, %v1008
      %v1010 = vand.u32 %v1009, 4294901760
      %1011 = vmatpush1.msra.mxu0 %v1010
      %1012 = vmatprep.subr.mxu0 0.0
      %v1013 = vand.u32 %v262, 4294901760
      %v1014 = vsub.f32 %v262, %v1013
      %v1015 = vand.u32 %v1014, 4294901760
      %1016 = vmatpush1.msra.mxu0 %v1015
      %1017 = vmatprep.subr.mxu0 0.0
      %v1018 = vand.u32 %v263, 4294901760
      %v1019 = vsub.f32 %v263, %v1018
      %v1020 = vand.u32 %v1019, 4294901760
      %1021 = vmatpush1.msra.mxu0 %v1020
      %1022 = vmatprep.subr.mxu0 0.0
      %v1023 = vand.u32 %v264, 4294901760
      %v1024 = vsub.f32 %v264, %v1023
      %v1025 = vand.u32 %v1024, 4294901760
      %1026 = vmatpush1.msra.mxu0 %v1025
      %1027 = vmatprep.subr.mxu0 0.0
      %v1028 = vand.u32 %v265, 4294901760
      %v1029 = vsub.f32 %v265, %v1028
      %v1030 = vand.u32 %v1029, 4294901760
      %1031 = vmatpush1.msra.mxu0 %v1030
      %v1032 = vand.u32 %v232, 4294901760
      %1033 = vmatprep.mubr.f32.mxu0 %v1032
      %v1034 = vand.u32 %v231, 4294901760
      %1035 = vmatmul.mubr.f32.gmra.mrb[0].mxu0 %v1034
      %v1036 = vpop.f32.mrb[0].mxu0
      %v1037 = vadd.f32 %v869, %v1036
      %v1038 = vpop.f32.mrb[0].mxu0
      %1039 = vdwg.mxu0
      %1040 = vmatprep.subr.mxu0 0.0
      %v1041 = vand.u32 %v234, 4294901760
      %1042 = vmatpush1.msra.mxu0 %v1041
      %1043 = vmatprep.subr.mxu0 0.0
      %v1044 = vand.u32 %v235, 4294901760
      %1045 = vmatpush1.msra.mxu0 %v1044
      %1046 = vmatprep.subr.mxu0 0.0
      %v1047 = vand.u32 %v236, 4294901760
      %1048 = vmatpush1.msra.mxu0 %v1047
      %1049 = vmatprep.subr.mxu0 0.0
      %v1050 = vand.u32 %v237, 4294901760
      %1051 = vmatpush1.msra.mxu0 %v1050
      %1052 = vmatprep.subr.mxu0 0.0
      %v1053 = vand.u32 %v238, 4294901760
      %1054 = vmatpush1.msra.mxu0 %v1053
      %1055 = vmatprep.subr.mxu0 0.0
      %v1056 = vand.u32 %v239, 4294901760
      %1057 = vmatpush1.msra.mxu0 %v1056
      %1058 = vmatprep.subr.mxu0 0.0
      %v1059 = vand.u32 %v240, 4294901760
      %1060 = vmatpush1.msra.mxu0 %v1059
      %1061 = vmatprep.subr.mxu0 0.0
      %v1062 = vand.u32 %v241, 4294901760
      %1063 = vmatpush1.msra.mxu0 %v1062
      %1064 = vmatprep.subr.mxu0 0.0
      %v1065 = vand.u32 %v242, 4294901760
      %1066 = vmatpush1.msra.mxu0 %v1065
      %1067 = vmatprep.subr.mxu0 0.0
      %v1068 = vand.u32 %v243, 4294901760
      %1069 = vmatpush1.msra.mxu0 %v1068
      %1070 = vmatprep.subr.mxu0 0.0
      %v1071 = vand.u32 %v244, 4294901760
      %1072 = vmatpush1.msra.mxu0 %v1071
      %1073 = vmatprep.subr.mxu0 0.0
      %v1074 = vand.u32 %v245, 4294901760
      %1075 = vmatpush1.msra.mxu0 %v1074
      %1076 = vmatprep.subr.mxu0 0.0
      %v1077 = vand.u32 %v246, 4294901760
      %1078 = vmatpush1.msra.mxu0 %v1077
      %1079 = vmatprep.subr.mxu0 0.0
      %v1080 = vand.u32 %v247, 4294901760
      %1081 = vmatpush1.msra.mxu0 %v1080
      %1082 = vmatprep.subr.mxu0 0.0
      %v1083 = vand.u32 %v248, 4294901760
      %1084 = vmatpush1.msra.mxu0 %v1083
      %1085 = vmatprep.subr.mxu0 0.0
      %v1086 = vand.u32 %v249, 4294901760
      %1087 = vmatpush1.msra.mxu0 %v1086
      %1088 = vmatprep.subr.mxu0 0.0
      %v1089 = vand.u32 %v250, 4294901760
      %1090 = vmatpush1.msra.mxu0 %v1089
      %1091 = vmatprep.subr.mxu0 0.0
      %v1092 = vand.u32 %v251, 4294901760
      %1093 = vmatpush1.msra.mxu0 %v1092
      %1094 = vmatprep.subr.mxu0 0.0
      %v1095 = vand.u32 %v252, 4294901760
      %1096 = vmatpush1.msra.mxu0 %v1095
      %1097 = vmatprep.subr.mxu0 0.0
      %v1098 = vand.u32 %v253, 4294901760
      %1099 = vmatpush1.msra.mxu0 %v1098
      %1100 = vmatprep.subr.mxu0 0.0
      %v1101 = vand.u32 %v254, 4294901760
      %1102 = vmatpush1.msra.mxu0 %v1101
      %1103 = vmatprep.subr.mxu0 0.0
      %v1104 = vand.u32 %v255, 4294901760
      %1105 = vmatpush1.msra.mxu0 %v1104
      %1106 = vmatprep.subr.mxu0 0.0
      %v1107 = vand.u32 %v256, 4294901760
      %1108 = vmatpush1.msra.mxu0 %v1107
      %1109 = vmatprep.subr.mxu0 0.0
      %v1110 = vand.u32 %v257, 4294901760
      %1111 = vmatpush1.msra.mxu0 %v1110
      %1112 = vmatprep.subr.mxu0 0.0
      %v1113 = vand.u32 %v258, 4294901760
      %1114 = vmatpush1.msra.mxu0 %v1113
      %1115 = vmatprep.subr.mxu0 0.0
      %v1116 = vand.u32 %v259, 4294901760
      %1117 = vmatpush1.msra.mxu0 %v1116
      %1118 = vmatprep.subr.mxu0 0.0
      %v1119 = vand.u32 %v260, 4294901760
      %1120 = vmatpush1.msra.mxu0 %v1119
      %1121 = vmatprep.subr.mxu0 0.0
      %v1122 = vand.u32 %v261, 4294901760
      %1123 = vmatpush1.msra.mxu0 %v1122
      %1124 = vmatprep.subr.mxu0 0.0
      %v1125 = vand.u32 %v262, 4294901760
      %1126 = vmatpush1.msra.mxu0 %v1125
      %1127 = vmatprep.subr.mxu0 0.0
      %v1128 = vand.u32 %v263, 4294901760
      %1129 = vmatpush1.msra.mxu0 %v1128
      %1130 = vmatprep.subr.mxu0 0.0
      %v1131 = vand.u32 %v264, 4294901760
      %1132 = vmatpush1.msra.mxu0 %v1131
      %1133 = vmatprep.subr.mxu0 0.0
      %v1134 = vand.u32 %v265, 4294901760
      %1135 = vmatpush1.msra.mxu0 %v1134
      %v1136 = vand.u32 %v232, 4294901760
      %1137 = vmatprep.mubr.f32.mxu0 %v1136
      %v1138 = vand.u32 %v231, 4294901760
      %1139 = vmatmul.mubr.f32.gmra.mrb[0].mxu0 %v1138
      %v1140 = vpop.f32.mrb[0].mxu0
      %v1141 = vadd.f32 %v1037, %v1140
      %v1142 = vpop.f32.mrb[0].mxu0
      %1143 = vdwg.mxu0
      %1144 = vmatprep.subr.mxu0 0.0
      %v1145 = vand.u32 %v266, 4294901760
      %1146 = vmatpush1.msra.mxu0 %v1145
      %1147 = vmatprep.subr.mxu0 0.0
      %v1148 = vand.u32 %v267, 4294901760
      %1149 = vmatpush1.msra.mxu0 %v1148
      %1150 = vmatprep.subr.mxu0 0.0
      %v1151 = vand.u32 %v268, 4294901760
      %1152 = vmatpush1.msra.mxu0 %v1151
      %1153 = vmatprep.subr.mxu0 0.0
      %v1154 = vand.u32 %v269, 4294901760
      %1155 = vmatpush1.msra.mxu0 %v1154
      %1156 = vmatprep.subr.mxu0 0.0
      %v1157 = vand.u32 %v270, 4294901760
      %1158 = vmatpush1.msra.mxu0 %v1157
      %1159 = vmatprep.subr.mxu0 0.0
      %v1160 = vand.u32 %v271, 4294901760
      %1161 = vmatpush1.msra.mxu0 %v1160
      %1162 = vmatprep.subr.mxu0 0.0
      %v1163 = vand.u32 %v272, 4294901760
      %1164 = vmatpush1.msra.mxu0 %v1163
      %1165 = vmatprep.subr.mxu0 0.0
      %v1166 = vand.u32 %v273, 4294901760
      %1167 = vmatpush1.msra.mxu0 %v1166
      %1168 = vmatprep.subr.mxu0 0.0
      %v1169 = vand.u32 %v274, 4294901760
      %1170 = vmatpush1.msra.mxu0 %v1169
      %1171 = vmatprep.subr.mxu0 0.0
      %v1172 = vand.u32 %v275, 4294901760
      %1173 = vmatpush1.msra.mxu0 %v1172
      %1174 = vmatprep.subr.mxu0 0.0
      %v1175 = vand.u32 %v276, 4294901760
      %1176 = vmatpush1.msra.mxu0 %v1175
      %1177 = vmatprep.subr.mxu0 0.0
      %v1178 = vand.u32 %v277, 4294901760
      %1179 = vmatpush1.msra.mxu0 %v1178
      %1180 = vmatprep.subr.mxu0 0.0
      %v1181 = vand.u32 %v278, 4294901760
      %1182 = vmatpush1.msra.mxu0 %v1181
      %1183 = vmatprep.subr.mxu0 0.0
      %v1184 = vand.u32 %v279, 4294901760
      %1185 = vmatpush1.msra.mxu0 %v1184
      %1186 = vmatprep.subr.mxu0 0.0
      %v1187 = vand.u32 %v280, 4294901760
      %1188 = vmatpush1.msra.mxu0 %v1187
      %1189 = vmatprep.subr.mxu0 0.0
      %v1190 = vand.u32 %v281, 4294901760
      %1191 = vmatpush1.msra.mxu0 %v1190
      %1192 = vmatprep.subr.mxu0 0.0
      %1193 = vmatpush1.msra.mxu0 0.0
      %1194 = vmatprep.subr.mxu0 0.0
      %1195 = vmatpush1.msra.mxu0 0.0
      %1196 = vmatprep.subr.mxu0 0.0
      %1197 = vmatpush1.msra.mxu0 0.0
      %1198 = vmatprep.subr.mxu0 0.0
      %1199 = vmatpush1.msra.mxu0 0.0
      %1200 = vmatprep.subr.mxu0 0.0
      %1201 = vmatpush1.msra.mxu0 0.0
      %1202 = vmatprep.subr.mxu0 0.0
      %1203 = vmatpush1.msra.mxu0 0.0
      %1204 = vmatprep.subr.mxu0 0.0
      %1205 = vmatpush1.msra.mxu0 0.0
      %1206 = vmatprep.subr.mxu0 0.0
      %1207 = vmatpush1.msra.mxu0 0.0
      %1208 = vmatprep.subr.mxu0 0.0
      %1209 = vmatpush1.msra.mxu0 0.0
      %1210 = vmatprep.subr.mxu0 0.0
      %1211 = vmatpush1.msra.mxu0 0.0
      %1212 = vmatprep.subr.mxu0 0.0
      %1213 = vmatpush1.msra.mxu0 0.0
      %1214 = vmatprep.subr.mxu0 0.0
      %1215 = vmatpush1.msra.mxu0 0.0
      %1216 = vmatprep.subr.mxu0 0.0
      %1217 = vmatpush1.msra.mxu0 0.0
      %1218 = vmatprep.subr.mxu0 0.0
      %1219 = vmatpush1.msra.mxu0 0.0
      %1220 = vmatprep.subr.mxu0 0.0
      %1221 = vmatpush1.msra.mxu0 0.0
      %1222 = vmatprep.subr.mxu0 0.0
      %1223 = vmatpush1.msra.mxu0 0.0
      %1224 = vmatprep.mubr.f32.mxu0 0.0
      %v1225 = vand.u32 %v233, 4294901760
      %v1226 = vsub.f32 %v233, %v1225
      %v1227 = vand.u32 %v1226, 4294901760
      %v1228 = vsub.f32 %v1226, %v1227
      %v1229 = vand.u32 %v1228, 4294901760
      %1230 = vmatmul.mubr.f32.gmra.mrb[0].mxu0 %v1229
      %v1231 = vpop.f32.mrb[0].mxu0
      %v1232 = vadd.f32 %v1141, %v1231
      %v1233 = vpop.f32.mrb[0].mxu0
      %1234 = vdwg.mxu0
      %1235 = vmatprep.subr.mxu0 0.0
      %v1236 = vand.u32 %v266, 4294901760
      %v1237 = vsub.f32 %v266, %v1236
      %v1238 = vand.u32 %v1237, 4294901760
      %v1239 = vsub.f32 %v1237, %v1238
      %v1240 = vand.u32 %v1239, 4294901760
      %1241 = vmatpush1.msra.mxu0 %v1240
      %1242 = vmatprep.subr.mxu0 0.0
      %v1243 = vand.u32 %v267, 4294901760
      %v1244 = vsub.f32 %v267, %v1243
      %v1245 = vand.u32 %v1244, 4294901760
      %v1246 = vsub.f32 %v1244, %v1245
      %v1247 = vand.u32 %v1246, 4294901760
      %1248 = vmatpush1.msra.mxu0 %v1247
      %1249 = vmatprep.subr.mxu0 0.0
      %v1250 = vand.u32 %v268, 4294901760
      %v1251 = vsub.f32 %v268, %v1250
      %v1252 = vand.u32 %v1251, 4294901760
      %v1253 = vsub.f32 %v1251, %v1252
      %v1254 = vand.u32 %v1253, 4294901760
      %1255 = vmatpush1.msra.mxu0 %v1254
      %1256 = vmatprep.subr.mxu0 0.0
      %v1257 = vand.u32 %v269, 4294901760
      %v1258 = vsub.f32 %v269, %v1257
      %v1259 = vand.u32 %v1258, 4294901760
      %v1260 = vsub.f32 %v1258, %v1259
      %v1261 = vand.u32 %v1260, 4294901760
      %1262 = vmatpush1.msra.mxu0 %v1261
      %1263 = vmatprep.subr.mxu0 0.0
      %v1264 = vand.u32 %v270, 4294901760
      %v1265 = vsub.f32 %v270, %v1264
      %v1266 = vand.u32 %v1265, 4294901760
      %v1267 = vsub.f32 %v1265, %v1266
      %v1268 = vand.u32 %v1267, 4294901760
      %1269 = vmatpush1.msra.mxu0 %v1268
      %1270 = vmatprep.subr.mxu0 0.0
      %v1271 = vand.u32 %v271, 4294901760
      %v1272 = vsub.f32 %v271, %v1271
      %v1273 = vand.u32 %v1272, 4294901760
      %v1274 = vsub.f32 %v1272, %v1273
      %v1275 = vand.u32 %v1274, 4294901760
      %1276 = vmatpush1.msra.mxu0 %v1275
      %1277 = vmatprep.subr.mxu0 0.0
      %v1278 = vand.u32 %v272, 4294901760
      %v1279 = vsub.f32 %v272, %v1278
      %v1280 = vand.u32 %v1279, 4294901760
      %v1281 = vsub.f32 %v1279, %v1280
      %v1282 = vand.u32 %v1281, 4294901760
      %1283 = vmatpush1.msra.mxu0 %v1282
      %1284 = vmatprep.subr.mxu0 0.0
      %v1285 = vand.u32 %v273, 4294901760
      %v1286 = vsub.f32 %v273, %v1285
      %v1287 = vand.u32 %v1286, 4294901760
      %v1288 = vsub.f32 %v1286, %v1287
      %v1289 = vand.u32 %v1288, 4294901760
      %1290 = vmatpush1.msra.mxu0 %v1289
      %1291 = vmatprep.subr.mxu0 0.0
      %v1292 = vand.u32 %v274, 4294901760
      %v1293 = vsub.f32 %v274, %v1292
      %v1294 = vand.u32 %v1293, 4294901760
      %v1295 = vsub.f32 %v1293, %v1294
      %v1296 = vand.u32 %v1295, 4294901760
      %1297 = vmatpush1.msra.mxu0 %v1296
      %1298 = vmatprep.subr.mxu0 0.0
      %v1299 = vand.u32 %v275, 4294901760
      %v1300 = vsub.f32 %v275, %v1299
      %v1301 = vand.u32 %v1300, 4294901760
      %v1302 = vsub.f32 %v1300, %v1301
      %v1303 = vand.u32 %v1302, 4294901760
      %1304 = vmatpush1.msra.mxu0 %v1303
      %1305 = vmatprep.subr.mxu0 0.0
      %v1306 = vand.u32 %v276, 4294901760
      %v1307 = vsub.f32 %v276, %v1306
      %v1308 = vand.u32 %v1307, 4294901760
      %v1309 = vsub.f32 %v1307, %v1308
      %v1310 = vand.u32 %v1309, 4294901760
      %1311 = vmatpush1.msra.mxu0 %v1310
      %1312 = vmatprep.subr.mxu0 0.0
      %v1313 = vand.u32 %v277, 4294901760
      %v1314 = vsub.f32 %v277, %v1313
      %v1315 = vand.u32 %v1314, 4294901760
      %v1316 = vsub.f32 %v1314, %v1315
      %v1317 = vand.u32 %v1316, 4294901760
      %1318 = vmatpush1.msra.mxu0 %v1317
      %1319 = vmatprep.subr.mxu0 0.0
      %v1320 = vand.u32 %v278, 4294901760
      %v1321 = vsub.f32 %v278, %v1320
      %v1322 = vand.u32 %v1321, 4294901760
      %v1323 = vsub.f32 %v1321, %v1322
      %v1324 = vand.u32 %v1323, 4294901760
      %1325 = vmatpush1.msra.mxu0 %v1324
      %1326 = vmatprep.subr.mxu0 0.0
      %v1327 = vand.u32 %v279, 4294901760
      %v1328 = vsub.f32 %v279, %v1327
      %v1329 = vand.u32 %v1328, 4294901760
      %v1330 = vsub.f32 %v1328, %v1329
      %v1331 = vand.u32 %v1330, 4294901760
      %1332 = vmatpush1.msra.mxu0 %v1331
      %1333 = vmatprep.subr.mxu0 0.0
      %v1334 = vand.u32 %v280, 4294901760
      %v1335 = vsub.f32 %v280, %v1334
      %v1336 = vand.u32 %v1335, 4294901760
      %v1337 = vsub.f32 %v1335, %v1336
      %v1338 = vand.u32 %v1337, 4294901760
      %1339 = vmatpush1.msra.mxu0 %v1338
      %1340 = vmatprep.subr.mxu0 0.0
      %v1341 = vand.u32 %v281, 4294901760
      %v1342 = vsub.f32 %v281, %v1341
      %v1343 = vand.u32 %v1342, 4294901760
      %v1344 = vsub.f32 %v1342, %v1343
      %v1345 = vand.u32 %v1344, 4294901760
      %1346 = vmatpush1.msra.mxu0 %v1345
      %1347 = vmatprep.subr.mxu0 0.0
      %1348 = vmatpush1.msra.mxu0 0.0
      %1349 = vmatprep.subr.mxu0 0.0
      %1350 = vmatpush1.msra.mxu0 0.0
      %1351 = vmatprep.subr.mxu0 0.0
      %1352 = vmatpush1.msra.mxu0 0.0
      %1353 = vmatprep.subr.mxu0 0.0
      %1354 = vmatpush1.msra.mxu0 0.0
      %1355 = vmatprep.subr.mxu0 0.0
      %1356 = vmatpush1.msra.mxu0 0.0
      %1357 = vmatprep.subr.mxu0 0.0
      %1358 = vmatpush1.msra.mxu0 0.0
      %1359 = vmatprep.subr.mxu0 0.0
      %1360 = vmatpush1.msra.mxu0 0.0
      %1361 = vmatprep.subr.mxu0 0.0
      %1362 = vmatpush1.msra.mxu0 0.0
      %1363 = vmatprep.subr.mxu0 0.0
      %1364 = vmatpush1.msra.mxu0 0.0
      %1365 = vmatprep.subr.mxu0 0.0
      %1366 = vmatpush1.msra.mxu0 0.0
      %1367 = vmatprep.subr.mxu0 0.0
      %1368 = vmatpush1.msra.mxu0 0.0
      %1369 = vmatprep.subr.mxu0 0.0
      %1370 = vmatpush1.msra.mxu0 0.0
      %1371 = vmatprep.subr.mxu0 0.0
      %1372 = vmatpush1.msra.mxu0 0.0
      %1373 = vmatprep.subr.mxu0 0.0
      %1374 = vmatpush1.msra.mxu0 0.0
      %1375 = vmatprep.subr.mxu0 0.0
      %1376 = vmatpush1.msra.mxu0 0.0
      %1377 = vmatprep.subr.mxu0 0.0
      %1378 = vmatpush1.msra.mxu0 0.0
      %1379 = vmatprep.mubr.f32.mxu0 0.0
      %v1380 = vand.u32 %v233, 4294901760
      %1381 = vmatmul.mubr.f32.gmra.mrb[0].mxu0 %v1380
      %v1382 = vpop.f32.mrb[0].mxu0
      %v1383 = vadd.f32 %v1232, %v1382
      %v1384 = vpop.f32.mrb[0].mxu0
      %1385 = vdwg.mxu0
      %1386 = vmatprep.subr.mxu0 0.0
      %v1387 = vand.u32 %v266, 4294901760
      %v1388 = vsub.f32 %v266, %v1387
      %1389 = vmatpush1.msra.mxu0 %v1388
      %1390 = vmatprep.subr.mxu0 0.0
      %v1391 = vand.u32 %v267, 4294901760
      %v1392 = vsub.f32 %v267, %v1391
      %1393 = vmatpush1.msra.mxu0 %v1392
      %1394 = vmatprep.subr.mxu0 0.0
      %v1395 = vand.u32 %v268, 4294901760
      %v1396 = vsub.f32 %v268, %v1395
      %1397 = vmatpush1.msra.mxu0 %v1396
      %1398 = vmatprep.subr.mxu0 0.0
      %v1399 = vand.u32 %v269, 4294901760
      %v1400 = vsub.f32 %v269, %v1399
      %1401 = vmatpush1.msra.mxu0 %v1400
      %1402 = vmatprep.subr.mxu0 0.0
      %v1403 = vand.u32 %v270, 4294901760
      %v1404 = vsub.f32 %v270, %v1403
      %1405 = vmatpush1.msra.mxu0 %v1404
      %1406 = vmatprep.subr.mxu0 0.0
      %v1407 = vand.u32 %v271, 4294901760
      %v1408 = vsub.f32 %v271, %v1407
      %1409 = vmatpush1.msra.mxu0 %v1408
      %1410 = vmatprep.subr.mxu0 0.0
      %v1411 = vand.u32 %v272, 4294901760
      %v1412 = vsub.f32 %v272, %v1411
      %1413 = vmatpush1.msra.mxu0 %v1412
      %1414 = vmatprep.subr.mxu0 0.0
      %v1415 = vand.u32 %v273, 4294901760
      %v1416 = vsub.f32 %v273, %v1415
      %1417 = vmatpush1.msra.mxu0 %v1416
      %1418 = vmatprep.subr.mxu0 0.0
      %v1419 = vand.u32 %v274, 4294901760
      %v1420 = vsub.f32 %v274, %v1419
      %1421 = vmatpush1.msra.mxu0 %v1420
      %1422 = vmatprep.subr.mxu0 0.0
      %v1423 = vand.u32 %v275, 4294901760
      %v1424 = vsub.f32 %v275, %v1423
      %1425 = vmatpush1.msra.mxu0 %v1424
      %1426 = vmatprep.subr.mxu0 0.0
      %v1427 = vand.u32 %v276, 4294901760
      %v1428 = vsub.f32 %v276, %v1427
      %1429 = vmatpush1.msra.mxu0 %v1428
      %1430 = vmatprep.subr.mxu0 0.0
      %v1431 = vand.u32 %v277, 4294901760
      %v1432 = vsub.f32 %v277, %v1431
      %1433 = vmatpush1.msra.mxu0 %v1432
      %1434 = vmatprep.subr.mxu0 0.0
      %v1435 = vand.u32 %v278, 4294901760
      %v1436 = vsub.f32 %v278, %v1435
      %1437 = vmatpush1.msra.mxu0 %v1436
      %1438 = vmatprep.subr.mxu0 0.0
      %v1439 = vand.u32 %v279, 4294901760
      %v1440 = vsub.f32 %v279, %v1439
      %1441 = vmatpush1.msra.mxu0 %v1440
      %1442 = vmatprep.subr.mxu0 0.0
      %v1443 = vand.u32 %v280, 4294901760
      %v1444 = vsub.f32 %v280, %v1443
      %1445 = vmatpush1.msra.mxu0 %v1444
      %1446 = vmatprep.subr.mxu0 0.0
      %v1447 = vand.u32 %v281, 4294901760
      %v1448 = vsub.f32 %v281, %v1447
      %1449 = vmatpush1.msra.mxu0 %v1448
      %1450 = vmatprep.subr.mxu0 0.0
      %1451 = vmatpush1.msra.mxu0 0.0
      %1452 = vmatprep.subr.mxu0 0.0
      %1453 = vmatpush1.msra.mxu0 0.0
      %1454 = vmatprep.subr.mxu0 0.0
      %1455 = vmatpush1.msra.mxu0 0.0
      %1456 = vmatprep.subr.mxu0 0.0
      %1457 = vmatpush1.msra.mxu0 0.0
      %1458 = vmatprep.subr.mxu0 0.0
      %1459 = vmatpush1.msra.mxu0 0.0
      %1460 = vmatprep.subr.mxu0 0.0
      %1461 = vmatpush1.msra.mxu0 0.0
      %1462 = vmatprep.subr.mxu0 0.0
      %1463 = vmatpush1.msra.mxu0 0.0
      %1464 = vmatprep.subr.mxu0 0.0
      %1465 = vmatpush1.msra.mxu0 0.0
      %1466 = vmatprep.subr.mxu0 0.0
      %1467 = vmatpush1.msra.mxu0 0.0
      %1468 = vmatprep.subr.mxu0 0.0
      %1469 = vmatpush1.msra.mxu0 0.0
      %1470 = vmatprep.subr.mxu0 0.0
      %1471 = vmatpush1.msra.mxu0 0.0
      %1472 = vmatprep.subr.mxu0 0.0
      %1473 = vmatpush1.msra.mxu0 0.0
      %1474 = vmatprep.subr.mxu0 0.0
      %1475 = vmatpush1.msra.mxu0 0.0
      %1476 = vmatprep.subr.mxu0 0.0
      %1477 = vmatpush1.msra.mxu0 0.0
      %1478 = vmatprep.subr.mxu0 0.0
      %1479 = vmatpush1.msra.mxu0 0.0
      %1480 = vmatprep.subr.mxu0 0.0
      %1481 = vmatpush1.msra.mxu0 0.0
      %1482 = vmatprep.mubr.f32.mxu0 0.0
      %v1483 = vand.u32 %v233, 4294901760
      %v1484 = vsub.f32 %v233, %v1483
      %1485 = vmatmul.mubr.f32.gmra.mrb[0].mxu0 %v1484
      %v1486 = vpop.f32.mrb[0].mxu0
      %v1487 = vadd.f32 %v1383, %v1486
      %v1488 = vpop.f32.mrb[0].mxu0
      %1489 = vdwg.mxu0
      %1490 = vmatprep.subr.mxu0 0.0
      %v1491 = vand.u32 %v266, 4294901760
      %1492 = vmatpush1.msra.mxu0 %v1491
      %1493 = vmatprep.subr.mxu0 0.0
      %v1494 = vand.u32 %v267, 4294901760
      %1495 = vmatpush1.msra.mxu0 %v1494
      %1496 = vmatprep.subr.mxu0 0.0
      %v1497 = vand.u32 %v268, 4294901760
      %1498 = vmatpush1.msra.mxu0 %v1497
      %1499 = vmatprep.subr.mxu0 0.0
      %v1500 = vand.u32 %v269, 4294901760
      %1501 = vmatpush1.msra.mxu0 %v1500
      %1502 = vmatprep.subr.mxu0 0.0
      %v1503 = vand.u32 %v270, 4294901760
      %1504 = vmatpush1.msra.mxu0 %v1503
      %1505 = vmatprep.subr.mxu0 0.0
      %v1506 = vand.u32 %v271, 4294901760
      %1507 = vmatpush1.msra.mxu0 %v1506
      %1508 = vmatprep.subr.mxu0 0.0
      %v1509 = vand.u32 %v272, 4294901760
      %1510 = vmatpush1.msra.mxu0 %v1509
      %1511 = vmatprep.subr.mxu0 0.0
      %v1512 = vand.u32 %v273, 4294901760
      %1513 = vmatpush1.msra.mxu0 %v1512
      %1514 = vmatprep.subr.mxu0 0.0
      %v1515 = vand.u32 %v274, 4294901760
      %1516 = vmatpush1.msra.mxu0 %v1515
      %1517 = vmatprep.subr.mxu0 0.0
      %v1518 = vand.u32 %v275, 4294901760
      %1519 = vmatpush1.msra.mxu0 %v1518
      %1520 = vmatprep.subr.mxu0 0.0
      %v1521 = vand.u32 %v276, 4294901760
      %1522 = vmatpush1.msra.mxu0 %v1521
      %1523 = vmatprep.subr.mxu0 0.0
      %v1524 = vand.u32 %v277, 4294901760
      %1525 = vmatpush1.msra.mxu0 %v1524
      %1526 = vmatprep.subr.mxu0 0.0
      %v1527 = vand.u32 %v278, 4294901760
      %1528 = vmatpush1.msra.mxu0 %v1527
      %1529 = vmatprep.subr.mxu0 0.0
      %v1530 = vand.u32 %v279, 4294901760
      %1531 = vmatpush1.msra.mxu0 %v1530
      %1532 = vmatprep.subr.mxu0 0.0
      %v1533 = vand.u32 %v280, 4294901760
      %1534 = vmatpush1.msra.mxu0 %v1533
      %1535 = vmatprep.subr.mxu0 0.0
      %v1536 = vand.u32 %v281, 4294901760
      %1537 = vmatpush1.msra.mxu0 %v1536
      %1538 = vmatprep.subr.mxu0 0.0
      %1539 = vmatpush1.msra.mxu0 0.0
      %1540 = vmatprep.subr.mxu0 0.0
      %1541 = vmatpush1.msra.mxu0 0.0
      %1542 = vmatprep.subr.mxu0 0.0
      %1543 = vmatpush1.msra.mxu0 0.0
      %1544 = vmatprep.subr.mxu0 0.0
      %1545 = vmatpush1.msra.mxu0 0.0
      %1546 = vmatprep.subr.mxu0 0.0
      %1547 = vmatpush1.msra.mxu0 0.0
      %1548 = vmatprep.subr.mxu0 0.0
      %1549 = vmatpush1.msra.mxu0 0.0
      %1550 = vmatprep.subr.mxu0 0.0
      %1551 = vmatpush1.msra.mxu0 0.0
      %1552 = vmatprep.subr.mxu0 0.0
      %1553 = vmatpush1.msra.mxu0 0.0
      %1554 = vmatprep.subr.mxu0 0.0
      %1555 = vmatpush1.msra.mxu0 0.0
      %1556 = vmatprep.subr.mxu0 0.0
      %1557 = vmatpush1.msra.mxu0 0.0
      %1558 = vmatprep.subr.mxu0 0.0
      %1559 = vmatpush1.msra.mxu0 0.0
      %1560 = vmatprep.subr.mxu0 0.0
      %1561 = vmatpush1.msra.mxu0 0.0
      %1562 = vmatprep.subr.mxu0 0.0
      %1563 = vmatpush1.msra.mxu0 0.0
      %1564 = vmatprep.subr.mxu0 0.0
      %1565 = vmatpush1.msra.mxu0 0.0
      %1566 = vmatprep.subr.mxu0 0.0
      %1567 = vmatpush1.msra.mxu0 0.0
      %1568 = vmatprep.subr.mxu0 0.0
      %1569 = vmatpush1.msra.mxu0 0.0
      %1570 = vmatprep.mubr.f32.mxu0 0.0
      %v1571 = vand.u32 %v233, 4294901760
      %v1572 = vsub.f32 %v233, %v1571
      %v1573 = vand.u32 %v1572, 4294901760
      %1574 = vmatmul.mubr.f32.gmra.mrb[0].mxu0 %v1573
      %v1575 = vpop.f32.mrb[0].mxu0
      %v1576 = vadd.f32 %v1487, %v1575
      %v1577 = vpop.f32.mrb[0].mxu0
      %1578 = vdwg.mxu0
      %1579 = vmatprep.subr.mxu0 0.0
      %v1580 = vand.u32 %v266, 4294901760
      %v1581 = vsub.f32 %v266, %v1580
      %v1582 = vand.u32 %v1581, 4294901760
      %1583 = vmatpush1.msra.mxu0 %v1582
      %1584 = vmatprep.subr.mxu0 0.0
      %v1585 = vand.u32 %v267, 4294901760
      %v1586 = vsub.f32 %v267, %v1585
      %v1587 = vand.u32 %v1586, 4294901760
      %1588 = vmatpush1.msra.mxu0 %v1587
      %1589 = vmatprep.subr.mxu0 0.0
      %v1590 = vand.u32 %v268, 4294901760
      %v1591 = vsub.f32 %v268, %v1590
      %v1592 = vand.u32 %v1591, 4294901760
      %1593 = vmatpush1.msra.mxu0 %v1592
      %1594 = vmatprep.subr.mxu0 0.0
      %v1595 = vand.u32 %v269, 4294901760
      %v1596 = vsub.f32 %v269, %v1595
      %v1597 = vand.u32 %v1596, 4294901760
      %1598 = vmatpush1.msra.mxu0 %v1597
      %1599 = vmatprep.subr.mxu0 0.0
      %v1600 = vand.u32 %v270, 4294901760
      %v1601 = vsub.f32 %v270, %v1600
      %v1602 = vand.u32 %v1601, 4294901760
      %1603 = vmatpush1.msra.mxu0 %v1602
      %1604 = vmatprep.subr.mxu0 0.0
      %v1605 = vand.u32 %v271, 4294901760
      %v1606 = vsub.f32 %v271, %v1605
      %v1607 = vand.u32 %v1606, 4294901760
      %1608 = vmatpush1.msra.mxu0 %v1607
      %1609 = vmatprep.subr.mxu0 0.0
      %v1610 = vand.u32 %v272, 4294901760
      %v1611 = vsub.f32 %v272, %v1610
      %v1612 = vand.u32 %v1611, 4294901760
      %1613 = vmatpush1.msra.mxu0 %v1612
      %1614 = vmatprep.subr.mxu0 0.0
      %v1615 = vand.u32 %v273, 4294901760
      %v1616 = vsub.f32 %v273, %v1615
      %v1617 = vand.u32 %v1616, 4294901760
      %1618 = vmatpush1.msra.mxu0 %v1617
      %1619 = vmatprep.subr.mxu0 0.0
      %v1620 = vand.u32 %v274, 4294901760
      %v1621 = vsub.f32 %v274, %v1620
      %v1622 = vand.u32 %v1621, 4294901760
      %1623 = vmatpush1.msra.mxu0 %v1622
      %1624 = vmatprep.subr.mxu0 0.0
      %v1625 = vand.u32 %v275, 4294901760
      %v1626 = vsub.f32 %v275, %v1625
      %v1627 = vand.u32 %v1626, 4294901760
      %1628 = vmatpush1.msra.mxu0 %v1627
      %1629 = vmatprep.subr.mxu0 0.0
      %v1630 = vand.u32 %v276, 4294901760
      %v1631 = vsub.f32 %v276, %v1630
      %v1632 = vand.u32 %v1631, 4294901760
      %1633 = vmatpush1.msra.mxu0 %v1632
      %1634 = vmatprep.subr.mxu0 0.0
      %v1635 = vand.u32 %v277, 4294901760
      %v1636 = vsub.f32 %v277, %v1635
      %v1637 = vand.u32 %v1636, 4294901760
      %1638 = vmatpush1.msra.mxu0 %v1637
      %1639 = vmatprep.subr.mxu0 0.0
      %v1640 = vand.u32 %v278, 4294901760
      %v1641 = vsub.f32 %v278, %v1640
      %v1642 = vand.u32 %v1641, 4294901760
      %1643 = vmatpush1.msra.mxu0 %v1642
      %1644 = vmatprep.subr.mxu0 0.0
      %v1645 = vand.u32 %v279, 4294901760
      %v1646 = vsub.f32 %v279, %v1645
      %v1647 = vand.u32 %v1646, 4294901760
      %1648 = vmatpush1.msra.mxu0 %v1647
      %1649 = vmatprep.subr.mxu0 0.0
      %v1650 = vand.u32 %v280, 4294901760
      %v1651 = vsub.f32 %v280, %v1650
      %v1652 = vand.u32 %v1651, 4294901760
      %1653 = vmatpush1.msra.mxu0 %v1652
      %1654 = vmatprep.subr.mxu0 0.0
      %v1655 = vand.u32 %v281, 4294901760
      %v1656 = vsub.f32 %v281, %v1655
      %v1657 = vand.u32 %v1656, 4294901760
      %1658 = vmatpush1.msra.mxu0 %v1657
      %1659 = vmatprep.subr.mxu0 0.0
      %1660 = vmatpush1.msra.mxu0 0.0
      %1661 = vmatprep.subr.mxu0 0.0
      %1662 = vmatpush1.msra.mxu0 0.0
      %1663 = vmatprep.subr.mxu0 0.0
      %1664 = vmatpush1.msra.mxu0 0.0
      %1665 = vmatprep.subr.mxu0 0.0
      %1666 = vmatpush1.msra.mxu0 0.0
      %1667 = vmatprep.subr.mxu0 0.0
      %1668 = vmatpush1.msra.mxu0 0.0
      %1669 = vmatprep.subr.mxu0 0.0
      %1670 = vmatpush1.msra.mxu0 0.0
      %1671 = vmatprep.subr.mxu0 0.0
      %1672 = vmatpush1.msra.mxu0 0.0
      %1673 = vmatprep.subr.mxu0 0.0
      %1674 = vmatpush1.msra.mxu0 0.0
      %1675 = vmatprep.subr.mxu0 0.0
      %1676 = vmatpush1.msra.mxu0 0.0
      %1677 = vmatprep.subr.mxu0 0.0
      %1678 = vmatpush1.msra.mxu0 0.0
      %1679 = vmatprep.subr.mxu0 0.0
      %1680 = vmatpush1.msra.mxu0 0.0
      %1681 = vmatprep.subr.mxu0 0.0
      %1682 = vmatpush1.msra.mxu0 0.0
      %1683 = vmatprep.subr.mxu0 0.0
      %1684 = vmatpush1.msra.mxu0 0.0
      %1685 = vmatprep.subr.mxu0 0.0
      %1686 = vmatpush1.msra.mxu0 0.0
      %1687 = vmatprep.subr.mxu0 0.0
      %1688 = vmatpush1.msra.mxu0 0.0
      %1689 = vmatprep.subr.mxu0 0.0
      %1690 = vmatpush1.msra.mxu0 0.0
      %1691 = vmatprep.mubr.f32.mxu0 0.0
      %v1692 = vand.u32 %v233, 4294901760
      %1693 = vmatmul.mubr.f32.gmra.mrb[0].mxu0 %v1692
      %v1694 = vpop.f32.mrb[0].mxu0
      %v1695 = vadd.f32 %v1576, %v1694
      %v1696 = vpop.f32.mrb[0].mxu0
      %1697 = vdwg.mxu0
      %1698 = vmatprep.subr.mxu0 0.0
      %v1699 = vand.u32 %v266, 4294901760
      %1700 = vmatpush1.msra.mxu0 %v1699
      %1701 = vmatprep.subr.mxu0 0.0
      %v1702 = vand.u32 %v267, 4294901760
      %1703 = vmatpush1.msra.mxu0 %v1702
      %1704 = vmatprep.subr.mxu0 0.0
      %v1705 = vand.u32 %v268, 4294901760
      %1706 = vmatpush1.msra.mxu0 %v1705
      %1707 = vmatprep.subr.mxu0 0.0
      %v1708 = vand.u32 %v269, 4294901760
      %1709 = vmatpush1.msra.mxu0 %v1708
      %1710 = vmatprep.subr.mxu0 0.0
      %v1711 = vand.u32 %v270, 4294901760
      %1712 = vmatpush1.msra.mxu0 %v1711
      %1713 = vmatprep.subr.mxu0 0.0
      %v1714 = vand.u32 %v271, 4294901760
      %1715 = vmatpush1.msra.mxu0 %v1714
      %1716 = vmatprep.subr.mxu0 0.0
      %v1717 = vand.u32 %v272, 4294901760
      %1718 = vmatpush1.msra.mxu0 %v1717
      %1719 = vmatprep.subr.mxu0 0.0
      %v1720 = vand.u32 %v273, 4294901760
      %1721 = vmatpush1.msra.mxu0 %v1720
      %1722 = vmatprep.subr.mxu0 0.0
      %v1723 = vand.u32 %v274, 4294901760
      %1724 = vmatpush1.msra.mxu0 %v1723
      %1725 = vmatprep.subr.mxu0 0.0
      %v1726 = vand.u32 %v275, 4294901760
      %1727 = vmatpush1.msra.mxu0 %v1726
      %1728 = vmatprep.subr.mxu0 0.0
      %v1729 = vand.u32 %v276, 4294901760
      %1730 = vmatpush1.msra.mxu0 %v1729
      %1731 = vmatprep.subr.mxu0 0.0
      %v1732 = vand.u32 %v277, 4294901760
      %1733 = vmatpush1.msra.mxu0 %v1732
      %1734 = vmatprep.subr.mxu0 0.0
      %v1735 = vand.u32 %v278, 4294901760
      %1736 = vmatpush1.msra.mxu0 %v1735
      %1737 = vmatprep.subr.mxu0 0.0
      %v1738 = vand.u32 %v279, 4294901760
      %1739 = vmatpush1.msra.mxu0 %v1738
      %1740 = vmatprep.subr.mxu0 0.0
      %v1741 = vand.u32 %v280, 4294901760
      %1742 = vmatpush1.msra.mxu0 %v1741
      %1743 = vmatprep.subr.mxu0 0.0
      %v1744 = vand.u32 %v281, 4294901760
      %1745 = vmatpush1.msra.mxu0 %v1744
      %1746 = vmatprep.subr.mxu0 0.0
      %1747 = vmatpush1.msra.mxu0 0.0
      %1748 = vmatprep.subr.mxu0 0.0
      %1749 = vmatpush1.msra.mxu0 0.0
      %1750 = vmatprep.subr.mxu0 0.0
      %1751 = vmatpush1.msra.mxu0 0.0
      %1752 = vmatprep.subr.mxu0 0.0
      %1753 = vmatpush1.msra.mxu0 0.0
      %1754 = vmatprep.subr.mxu0 0.0
      %1755 = vmatpush1.msra.mxu0 0.0
      %1756 = vmatprep.subr.mxu0 0.0
      %1757 = vmatpush1.msra.mxu0 0.0
      %1758 = vmatprep.subr.mxu0 0.0
      %1759 = vmatpush1.msra.mxu0 0.0
      %1760 = vmatprep.subr.mxu0 0.0
      %1761 = vmatpush1.msra.mxu0 0.0
      %1762 = vmatprep.subr.mxu0 0.0
      %1763 = vmatpush1.msra.mxu0 0.0
      %1764 = vmatprep.subr.mxu0 0.0
      %1765 = vmatpush1.msra.mxu0 0.0
      %1766 = vmatprep.subr.mxu0 0.0
      %1767 = vmatpush1.msra.mxu0 0.0
      %1768 = vmatprep.subr.mxu0 0.0
      %1769 = vmatpush1.msra.mxu0 0.0
      %1770 = vmatprep.subr.mxu0 0.0
      %1771 = vmatpush1.msra.mxu0 0.0
      %1772 = vmatprep.subr.mxu0 0.0
      %1773 = vmatpush1.msra.mxu0 0.0
      %1774 = vmatprep.subr.mxu0 0.0
      %1775 = vmatpush1.msra.mxu0 0.0
      %1776 = vmatprep.subr.mxu0 0.0
      %1777 = vmatpush1.msra.mxu0 0.0
      %1778 = vmatprep.mubr.f32.mxu0 0.0
      %v1779 = vand.u32 %v233, 4294901760
      %1780 = vmatmul.mubr.f32.gmra.mrb[0].mxu0 %v1779
      %v1781 = vpop.f32.mrb[0].mxu0
      %v1782 = vadd.f32 %v1695, %v1781
      %v1783 = vpop.f32.mrb[0].mxu0
      %1784 = vdwg.mxu0
      %v1785 = vld [vmem:[%s181] sm:$0xff]
      %v1786 = vsub.f32 0.0, %v1785
      %v1787 = vmax.f32 %v1786, 0.0
      %v1788 = vand.u32 2147483647, %v1786
      %v1789 = vsub.f32 0.0, %v1788
      %v1790 = vmul.f32 %v1789, 1.442695
      %v1791 = vpow.pop %v1790
      %v1792 = vadd.f32 %v1791, 1.0
      %v1793 = vlog2.pop %v1792
      %v1794 = vmul.f32 %v1793, 0.6931472
      %v1795 = vmul.f32 -0.5, %v1791
      %v1796 = vadd.f32 %v1795, 1.0
      %v1797 = vmul.f32 %v1796, %v1791
      %v1798 = vand.u32 2147483647, %v1791
      %vm1799 = vcmp.lt.f32.partialorder %v1798, 0.0004427343
      %v1800 = vsel %vm1799, %v1797, %v1794
      %v1801 = vadd.f32 %v1787, %v1800
      %v1802 = vadd.f32 %v1801, %v1782
      %vm1803 = vcmask 130048
      %1804 = vst.msk [vmem:[%s185] sm:$0xff] %vm1803, %v1802
      %p1805 = scmp.lt.s32.totalorder %s14, 3
      %s1806 = scalar_select %p1805, %s14, 3
      %s1807 = smul.addr %s1806, 8
      %s1808 = scalar_lea.vmem %s3, %s1807
      // Predicated region
      $region33: #{tpu_custom_call.1} parent=31 // pred_check
        %p1809 = pneg %p105
      $region34: #{tpu_custom_call.1} parent=31 // pred_check_branch
        %1811 = sbr.rel (%p1809) target = $region36
      $region35: #{tpu_custom_call.1} parent=31 // pred_region
        _
      $region36: #{tpu_custom_call.1} parent=31 // pred_fallthru
        _
    $region32: #{tpu_custom_call.1} parent=5 // pred_fallthru
      _
    %p1812 = scmp.le.s32.totalorder 2, %s9
    // Predicated region
    $region37: #{tpu_custom_call.1} parent=5 // pred_check
      %p1813 = pneg %p1812
    $region38: #{tpu_custom_call.1} parent=5 // pred_check_branch
      %1815 = sbr.rel (%p1813) target = $region40
    $region39: #{tpu_custom_call.1} parent=5 // pred_region
      %s1816 = ssub.s32 %s9, 2
      // Predicated region
      $region41: #{tpu_custom_call.1} parent=39 // pred_check
        %p1817 = pneg %p111
      $region42: #{tpu_custom_call.1} parent=39 // pred_check_branch
        %1819 = sbr.rel (%p1817) target = $region44
      $region43: #{tpu_custom_call.1} parent=39 // pred_region
        %p1820 = scmp.lt.s32.totalorder %s15, 3
        %s1821 = scalar_select %p1820, %s15, 3
        %s1822 = smul.addr %s1821, 8
        %s1823 = scalar_lea.vmem %s3, %s1822
      $region44: #{tpu_custom_call.1} parent=39 // pred_fallthru
        _
    $region40: #{tpu_custom_call.1} parent=5 // pred_fallthru
      _
  $region6: #{tpu_custom_call.1} parent=0 // loop_footer
    %s13 = sadd.s32 1, %s9
  $region7: #{tpu_custom_call.1} parent=0 // loop_footer_branch
    %8 = sbr.rel target = $region3
  $region8: #{tpu_custom_call.1} parent=0 // loop_exit
    _

</llo_original>
